<compile_context>
chip_gen: v7x
topology: tpu7x:2x2x1
jax: 0.10.0
libtpu: 0.0.40
codegen_flags: <defaults>
</compile_context>

<pallas_src>
import functools

import jax
import jax.numpy as jnp
from jax.experimental import pallas as pl
from jax.experimental.pallas import tpu as pltpu


def _lstm_net_kernel(
    S, Bp,                       # static: seq length, padded batch
    x_ref,                       # (S*Bp, input_dim)   time-major, flattened
    w1_ref, b1_ref,              # (input_dim, H), (1, H)
    wih_ref,                     # (H, 4L)   gate order i,f,g,o along columns
    whh_ref,                     # (L, 4L)
    bg_ref,                      # (1, 4L)   b_ih + b_hh
    w2_ref, b2_ref,              # (L, out_dim), (1, out_dim)
    out_ref,                     # (Bp, out_dim)
    gx_scr,                      # VMEM scratch (S*Bp, 4L)
):
    L = whh_ref.shape[0]

    # ---- Phase 1: everything that does not depend on h_prev, all timesteps
    # at once (one big MXU-friendly matmul instead of 5 tiny ones per step).
    x = x_ref[...]                                               # (S*Bp, Din)
    z = jnp.maximum(
        jnp.dot(x, w1_ref[...], preferred_element_type=jnp.float32) + b1_ref[...],
        0.0)                                                     # (S*Bp, H)
    gx_scr[...] = (jnp.dot(z, wih_ref[...], preferred_element_type=jnp.float32)
                   + bg_ref[...])                                # (S*Bp, 4L)

    # Hoist the recurrent weight load out of the loop.
    whh = whh_ref[...]                                           # (L, 4L)

    # ---- Phase 2: serial LSTM recurrence. h/c live in vregs (loop carries).
    def step(t, carry):
        h, c = carry
        base = pl.multiple_of(t * Bp, Bp)
        gates = gx_scr[pl.ds(base, Bp), :] + jnp.dot(
            h, whh, preferred_element_type=jnp.float32)          # (Bp, 4L)
        # PyTorch gate order: i, f, g, o.
        i_g = jax.nn.sigmoid(gates[:, 0 * L:1 * L])
        f_g = jax.nn.sigmoid(gates[:, 1 * L:2 * L])
        g_g = jnp.tanh(gates[:, 2 * L:3 * L])
        o_g = jax.nn.sigmoid(gates[:, 3 * L:4 * L])
        c_new = f_g * c + i_g * g_g
        h_new = o_g * jnp.tanh(c_new)
        return (h_new, c_new)

    h0 = jnp.zeros((Bp, L), jnp.float32)
    c0 = jnp.zeros((Bp, L), jnp.float32)
    h_n, _ = jax.lax.fori_loop(0, S, step, (h0, c0), unroll=True)

    # ---- Final projection: hidden2(tanh(h_n)).
    out_ref[...] = (jnp.dot(jnp.tanh(h_n), w2_ref[...],
                            preferred_element_type=jnp.float32) + b2_ref[...])


def lstm_net_forward(x, params):
    """x: (batch, seq, input_dim)  ->  (batch, 1, out_dim)."""
    B, S, Din = x.shape
    L = params["whh_cat"].shape[0]
    Dout = params["w2"].shape[1]

    # Pad batch to a sublane multiple so all (B, *) tiles are unmasked.
    Bp = ((B + 7) // 8) * 8
    x_sbd = jnp.transpose(x, (1, 0, 2))                   # (S, B, Din)
    if Bp != B:
        x_sbd = jnp.pad(x_sbd, ((0, 0), (0, Bp - B), (0, 0)))
    x_flat = x_sbd.reshape(S * Bp, Din)                   # time-major, flattened

    kernel = functools.partial(_lstm_net_kernel, S, Bp)

    out_p = pl.pallas_call(
        kernel,
        out_shape=jax.ShapeDtypeStruct((Bp, Dout), jnp.float32),
        scratch_shapes=[pltpu.VMEM((S * Bp, 4 * L), jnp.float32)],
    )(x_flat,
      params["w1"], params["b1"],
      params["wih_cat"], params["whh_cat"], params["bgate"],
      params["w2"], params["b2"])

    # Drop batch padding, restore (B, 1, out_dim) to match PyTorch forward.
    return out_p[:B, None, :]


def init_params(key, input_dim, hidden_dim, lstm_dim, out_dim):
    ks = jax.random.split(key, 8)
    s = 0.1
    f32 = jnp.float32
    L = lstm_dim
    p = {}
    p["w1"] = s * jax.random.normal(ks[0], (input_dim, hidden_dim), f32)
    p["b1"] = s * jax.random.normal(ks[1], (1, hidden_dim), f32)
    # PyTorch LSTM weights are (4L, H)/(4L, L) in gate order i,f,g,o.
    # Fuse into single transposed matrices so the kernel does x @ W with one
    # lane-dense (*, 4L) output.
    w_ih = s * jax.random.normal(ks[2], (4 * L, hidden_dim), f32)
    w_hh = s * jax.random.normal(ks[3], (4 * L, L), f32)
    b_ih = s * jax.random.normal(ks[4], (4 * L,), f32)
    b_hh = s * jax.random.normal(ks[5], (4 * L,), f32)
    p["wih_cat"] = w_ih.T                                  # (H, 4L)
    p["whh_cat"] = w_hh.T                                  # (L, 4L)
    p["bgate"] = (b_ih + b_hh)[None, :]                    # (1, 4L)
    p["w2"] = s * jax.random.normal(ks[6], (lstm_dim, out_dim), f32)
    p["b2"] = s * jax.random.normal(ks[7], (1, out_dim), f32)
    return p


def reference_forward(x, params):
    """Pure-JAX reference replicating the PyTorch forward."""
    z = jnp.maximum(jnp.einsum("bsi,ih->bsh", x, params["w1"]) + params["b1"], 0.0)

    B = x.shape[0]
    L = params["whh_cat"].shape[0]
    wih, whh, bg = params["wih_cat"], params["whh_cat"], params["bgate"]
    h0 = jnp.zeros((B, L), jnp.float32)
    c0 = jnp.zeros((B, L), jnp.float32)

    def step(carry, z_t):
        h, c = carry
        g = z_t @ wih + h @ whh + bg
        i = jax.nn.sigmoid(g[:, 0 * L:1 * L])
        f = jax.nn.sigmoid(g[:, 1 * L:2 * L])
        gg = jnp.tanh(g[:, 2 * L:3 * L])
        o = jax.nn.sigmoid(g[:, 3 * L:4 * L])
        c = f * c + i * gg
        h = o * jnp.tanh(c)
        return (h, c), None

    (h_n, _), _ = jax.lax.scan(step, (h0, c0), jnp.transpose(z, (1, 0, 2)))
    wl = jnp.tanh(h_n) @ params["w2"] + params["b2"]        # (B, out_dim)
    return wl[:, None, :]                                   # (B, 1, out_dim)


if __name__ == "__main__":
    batch, seq = 4, 8
    input_dim, hidden_dim, lstm_dim, out_dim = 8, 32, 32, 4

    key = jax.random.PRNGKey(0)
    k_x, k_p = jax.random.split(key)
    x = jax.random.normal(k_x, (batch, seq, input_dim), jnp.float32)
    params = init_params(k_p, input_dim, hidden_dim, lstm_dim, out_dim)

    out = jax.block_until_ready(lstm_net_forward(x, params))
    ref = jax.block_until_ready(reference_forward(x, params))

    assert out.shape == (batch, 1, out_dim), out.shape
    assert jnp.allclose(out, ref, atol=1e-5, rtol=1e-5), (
        f"max abs err {jnp.max(jnp.abs(out - ref))}")

    print("KERNEL_OK")
</pallas_src>

<mosaic_0001>
module attributes {stable_mosaic.version = 11 : i64} {
  func.func @_lstm_net_kernel(%arg0: memref<64x8xf32, #tpu.memory_space<vmem>>, %arg1: memref<8x32xf32, #tpu.memory_space<vmem>>, %arg2: memref<1x32xf32, #tpu.memory_space<vmem>>, %arg3: memref<32x128xf32, #tpu.memory_space<vmem>>, %arg4: memref<32x128xf32, #tpu.memory_space<vmem>>, %arg5: memref<1x128xf32, #tpu.memory_space<vmem>>, %arg6: memref<32x4xf32, #tpu.memory_space<vmem>>, %arg7: memref<1x4xf32, #tpu.memory_space<vmem>>, %arg8: memref<8x4xf32, #tpu.memory_space<vmem>>, %arg9: memref<64x128xf32, #tpu.memory_space<vmem>>) attributes {dimension_semantics = [], scalar_prefetch = 0 : i64, scratch_operands = 1 : i64, tpu.core_type = #tpu.core_type<tc>} {
    %c0 = arith.constant 0 : index
    %c0_0 = arith.constant 0 : index
    %0 = vector.load %arg0[%c0, %c0_0] : memref<64x8xf32, #tpu.memory_space<vmem>>, vector<64x8xf32>
    %c0_1 = arith.constant 0 : index
    %c0_2 = arith.constant 0 : index
    %1 = vector.load %arg1[%c0_1, %c0_2] : memref<8x32xf32, #tpu.memory_space<vmem>>, vector<8x32xf32>
    %cst = arith.constant dense<0.000000e+00> : vector<64x32xf32>
    %2 = tpu.matmul %0, %1, %cst {dimension_numbers = #tpu.dot_dimension_numbers<[1], [0], [0], [1], [0, 0, 1, 1], [], []>} : vector<64x8xf32>, vector<8x32xf32>, vector<64x32xf32> -> vector<64x32xf32>
    %c0_3 = arith.constant 0 : index
    %c0_4 = arith.constant 0 : index
    %3 = vector.load %arg2[%c0_3, %c0_4] : memref<1x32xf32, #tpu.memory_space<vmem>>, vector<1x32xf32>
    %4 = vector.broadcast %3 : vector<1x32xf32> to vector<64x32xf32>
    %5 = arith.addf %2, %4 : vector<64x32xf32>
    %cst_5 = arith.constant 0.000000e+00 : f32
    %6 = vector.broadcast %cst_5 : f32 to vector<64x32xf32>
    %7 = arith.maximumf %5, %6 : vector<64x32xf32>
    %c0_6 = arith.constant 0 : index
    %c0_7 = arith.constant 0 : index
    %8 = vector.load %arg3[%c0_6, %c0_7] : memref<32x128xf32, #tpu.memory_space<vmem>>, vector<32x128xf32>
    %cst_8 = arith.constant dense<0.000000e+00> : vector<64x128xf32>
    %9 = tpu.matmul %7, %8, %cst_8 {dimension_numbers = #tpu.dot_dimension_numbers<[1], [0], [0], [1], [0, 0, 1, 1], [], []>} : vector<64x32xf32>, vector<32x128xf32>, vector<64x128xf32> -> vector<64x128xf32>
    %c0_9 = arith.constant 0 : index
    %c0_10 = arith.constant 0 : index
    %10 = vector.load %arg5[%c0_9, %c0_10] : memref<1x128xf32, #tpu.memory_space<vmem>>, vector<1x128xf32>
    %11 = vector.broadcast %10 : vector<1x128xf32> to vector<64x128xf32>
    %12 = arith.addf %9, %11 : vector<64x128xf32>
    %c0_11 = arith.constant 0 : index
    %c0_12 = arith.constant 0 : index
    %13 = vector.load %arg9[%c0_11, %c0_12] : memref<64x128xf32, #tpu.memory_space<vmem>>, vector<64x128xf32>
    tpu.vector_store %arg9[%c0_11, %c0_12], %12 {strides = array<i32>} : memref<64x128xf32, #tpu.memory_space<vmem>>, vector<64x128xf32>,
    %c0_13 = arith.constant 0 : index
    %c0_14 = arith.constant 0 : index
    %14 = vector.load %arg4[%c0_13, %c0_14] : memref<32x128xf32, #tpu.memory_space<vmem>>, vector<32x128xf32>
    %cst_15 = arith.constant 0.000000e+00 : f32
    %15 = vector.broadcast %cst_15 : f32 to vector<8x32xf32>
    %cst_16 = arith.constant 0.000000e+00 : f32
    %16 = vector.broadcast %cst_16 : f32 to vector<8x32xf32>
    %c0_i32 = arith.constant 0 : i32
    %c8_i32 = arith.constant 8 : i32
    %17 = arith.muli %c0_i32, %c8_i32 : i32
    %18 = tpu.assume_multiple %17, 8 : i32
    %19 = arith.index_cast %18 : i32 to index
    %c0_17 = arith.constant 0 : index
    %20 = vector.load %arg9[%19, %c0_17] : memref<64x128xf32, #tpu.memory_space<vmem>>, vector<8x128xf32>
    %cst_18 = arith.constant dense<0.000000e+00> : vector<8x128xf32>
    %21 = tpu.matmul %15, %14, %cst_18 {dimension_numbers = #tpu.dot_dimension_numbers<[1], [0], [0], [1], [0, 0, 1, 1], [], []>} : vector<8x32xf32>, vector<32x128xf32>, vector<8x128xf32> -> vector<8x128xf32>
    %22 = arith.addf %20, %21 : vector<8x128xf32>
    %23 = vector.extract_strided_slice %22 {offsets = [0, 0], sizes = [8, 32], strides = [1, 1]} : vector<8x128xf32> to vector<8x32xf32>
    %24 = arith.negf %23 : vector<8x32xf32>
    %25 = math.exp %24 : vector<8x32xf32>
    %cst_19 = arith.constant 1.000000e+00 : f32
    %26 = vector.broadcast %cst_19 : f32 to vector<8x32xf32>
    %27 = arith.addf %26, %25 : vector<8x32xf32>
    %28 = arith.divf %26, %27 : vector<8x32xf32>
    %29 = vector.extract_strided_slice %22 {offsets = [0, 32], sizes = [8, 32], strides = [1, 1]} : vector<8x128xf32> to vector<8x32xf32>
    %30 = arith.negf %29 : vector<8x32xf32>
    %31 = math.exp %30 : vector<8x32xf32>
    %cst_20 = arith.constant 1.000000e+00 : f32
    %32 = vector.broadcast %cst_20 : f32 to vector<8x32xf32>
    %33 = arith.addf %32, %31 : vector<8x32xf32>
    %34 = arith.divf %32, %33 : vector<8x32xf32>
    %35 = vector.extract_strided_slice %22 {offsets = [0, 64], sizes = [8, 32], strides = [1, 1]} : vector<8x128xf32> to vector<8x32xf32>
    %36 = math.tanh %35 : vector<8x32xf32>
    %37 = vector.extract_strided_slice %22 {offsets = [0, 96], sizes = [8, 32], strides = [1, 1]} : vector<8x128xf32> to vector<8x32xf32>
    %38 = arith.negf %37 : vector<8x32xf32>
    %39 = math.exp %38 : vector<8x32xf32>
    %cst_21 = arith.constant 1.000000e+00 : f32
    %40 = vector.broadcast %cst_21 : f32 to vector<8x32xf32>
    %41 = arith.addf %40, %39 : vector<8x32xf32>
    %42 = arith.divf %40, %41 : vector<8x32xf32>
    %43 = arith.mulf %34, %16 : vector<8x32xf32>
    %44 = arith.mulf %28, %36 : vector<8x32xf32>
    %45 = arith.addf %43, %44 : vector<8x32xf32>
    %46 = math.tanh %45 : vector<8x32xf32>
    %47 = arith.mulf %42, %46 : vector<8x32xf32>
    %c1_i32 = arith.constant 1 : i32
    %c8_i32_22 = arith.constant 8 : i32
    %48 = arith.muli %c1_i32, %c8_i32_22 : i32
    %49 = tpu.assume_multiple %48, 8 : i32
    %50 = arith.index_cast %49 : i32 to index
    %c0_23 = arith.constant 0 : index
    %51 = vector.load %arg9[%50, %c0_23] : memref<64x128xf32, #tpu.memory_space<vmem>>, vector<8x128xf32>
    %cst_24 = arith.constant dense<0.000000e+00> : vector<8x128xf32>
    %52 = tpu.matmul %47, %14, %cst_24 {dimension_numbers = #tpu.dot_dimension_numbers<[1], [0], [0], [1], [0, 0, 1, 1], [], []>} : vector<8x32xf32>, vector<32x128xf32>, vector<8x128xf32> -> vector<8x128xf32>
    %53 = arith.addf %51, %52 : vector<8x128xf32>
    %54 = vector.extract_strided_slice %53 {offsets = [0, 0], sizes = [8, 32], strides = [1, 1]} : vector<8x128xf32> to vector<8x32xf32>
    %55 = arith.negf %54 : vector<8x32xf32>
    %56 = math.exp %55 : vector<8x32xf32>
    %cst_25 = arith.constant 1.000000e+00 : f32
    %57 = vector.broadcast %cst_25 : f32 to vector<8x32xf32>
    %58 = arith.addf %57, %56 : vector<8x32xf32>
    %59 = arith.divf %57, %58 : vector<8x32xf32>
    %60 = vector.extract_strided_slice %53 {offsets = [0, 32], sizes = [8, 32], strides = [1, 1]} : vector<8x128xf32> to vector<8x32xf32>
    %61 = arith.negf %60 : vector<8x32xf32>
    %62 = math.exp %61 : vector<8x32xf32>
    %cst_26 = arith.constant 1.000000e+00 : f32
    %63 = vector.broadcast %cst_26 : f32 to vector<8x32xf32>
    %64 = arith.addf %63, %62 : vector<8x32xf32>
    %65 = arith.divf %63, %64 : vector<8x32xf32>
    %66 = vector.extract_strided_slice %53 {offsets = [0, 64], sizes = [8, 32], strides = [1, 1]} : vector<8x128xf32> to vector<8x32xf32>
    %67 = math.tanh %66 : vector<8x32xf32>
    %68 = vector.extract_strided_slice %53 {offsets = [0, 96], sizes = [8, 32], strides = [1, 1]} : vector<8x128xf32> to vector<8x32xf32>
    %69 = arith.negf %68 : vector<8x32xf32>
    %70 = math.exp %69 : vector<8x32xf32>
    %cst_27 = arith.constant 1.000000e+00 : f32
    %71 = vector.broadcast %cst_27 : f32 to vector<8x32xf32>
    %72 = arith.addf %71, %70 : vector<8x32xf32>
    %73 = arith.divf %71, %72 : vector<8x32xf32>
    %74 = arith.mulf %65, %45 : vector<8x32xf32>
    %75 = arith.mulf %59, %67 : vector<8x32xf32>
    %76 = arith.addf %74, %75 : vector<8x32xf32>
    %77 = math.tanh %76 : vector<8x32xf32>
    %78 = arith.mulf %73, %77 : vector<8x32xf32>
    %c2_i32 = arith.constant 2 : i32
    %c8_i32_28 = arith.constant 8 : i32
    %79 = arith.muli %c2_i32, %c8_i32_28 : i32
    %80 = tpu.assume_multiple %79, 8 : i32
    %81 = arith.index_cast %80 : i32 to index
    %c0_29 = arith.constant 0 : index
    %82 = vector.load %arg9[%81, %c0_29] : memref<64x128xf32, #tpu.memory_space<vmem>>, vector<8x128xf32>
    %cst_30 = arith.constant dense<0.000000e+00> : vector<8x128xf32>
    %83 = tpu.matmul %78, %14, %cst_30 {dimension_numbers = #tpu.dot_dimension_numbers<[1], [0], [0], [1], [0, 0, 1, 1], [], []>} : vector<8x32xf32>, vector<32x128xf32>, vector<8x128xf32> -> vector<8x128xf32>
    %84 = arith.addf %82, %83 : vector<8x128xf32>
    %85 = vector.extract_strided_slice %84 {offsets = [0, 0], sizes = [8, 32], strides = [1, 1]} : vector<8x128xf32> to vector<8x32xf32>
    %86 = arith.negf %85 : vector<8x32xf32>
    %87 = math.exp %86 : vector<8x32xf32>
    %cst_31 = arith.constant 1.000000e+00 : f32
    %88 = vector.broadcast %cst_31 : f32 to vector<8x32xf32>
    %89 = arith.addf %88, %87 : vector<8x32xf32>
    %90 = arith.divf %88, %89 : vector<8x32xf32>
    %91 = vector.extract_strided_slice %84 {offsets = [0, 32], sizes = [8, 32], strides = [1, 1]} : vector<8x128xf32> to vector<8x32xf32>
    %92 = arith.negf %91 : vector<8x32xf32>
    %93 = math.exp %92 : vector<8x32xf32>
    %cst_32 = arith.constant 1.000000e+00 : f32
    %94 = vector.broadcast %cst_32 : f32 to vector<8x32xf32>
    %95 = arith.addf %94, %93 : vector<8x32xf32>
    %96 = arith.divf %94, %95 : vector<8x32xf32>
    %97 = vector.extract_strided_slice %84 {offsets = [0, 64], sizes = [8, 32], strides = [1, 1]} : vector<8x128xf32> to vector<8x32xf32>
    %98 = math.tanh %97 : vector<8x32xf32>
    %99 = vector.extract_strided_slice %84 {offsets = [0, 96], sizes = [8, 32], strides = [1, 1]} : vector<8x128xf32> to vector<8x32xf32>
    %100 = arith.negf %99 : vector<8x32xf32>
    %101 = math.exp %100 : vector<8x32xf32>
    %cst_33 = arith.constant 1.000000e+00 : f32
    %102 = vector.broadcast %cst_33 : f32 to vector<8x32xf32>
    %103 = arith.addf %102, %101 : vector<8x32xf32>
    %104 = arith.divf %102, %103 : vector<8x32xf32>
    %105 = arith.mulf %96, %76 : vector<8x32xf32>
    %106 = arith.mulf %90, %98 : vector<8x32xf32>
    %107 = arith.addf %105, %106 : vector<8x32xf32>
    %108 = math.tanh %107 : vector<8x32xf32>
    %109 = arith.mulf %104, %108 : vector<8x32xf32>
    %c3_i32 = arith.constant 3 : i32
    %c8_i32_34 = arith.constant 8 : i32
    %110 = arith.muli %c3_i32, %c8_i32_34 : i32
    %111 = tpu.assume_multiple %110, 8 : i32
    %112 = arith.index_cast %111 : i32 to index
    %c0_35 = arith.constant 0 : index
    %113 = vector.load %arg9[%112, %c0_35] : memref<64x128xf32, #tpu.memory_space<vmem>>, vector<8x128xf32>
    %cst_36 = arith.constant dense<0.000000e+00> : vector<8x128xf32>
    %114 = tpu.matmul %109, %14, %cst_36 {dimension_numbers = #tpu.dot_dimension_numbers<[1], [0], [0], [1], [0, 0, 1, 1], [], []>} : vector<8x32xf32>, vector<32x128xf32>, vector<8x128xf32> -> vector<8x128xf32>
    %115 = arith.addf %113, %114 : vector<8x128xf32>
    %116 = vector.extract_strided_slice %115 {offsets = [0, 0], sizes = [8, 32], strides = [1, 1]} : vector<8x128xf32> to vector<8x32xf32>
    %117 = arith.negf %116 : vector<8x32xf32>
    %118 = math.exp %117 : vector<8x32xf32>
    %cst_37 = arith.constant 1.000000e+00 : f32
    %119 = vector.broadcast %cst_37 : f32 to vector<8x32xf32>
    %120 = arith.addf %119, %118 : vector<8x32xf32>
    %121 = arith.divf %119, %120 : vector<8x32xf32>
    %122 = vector.extract_strided_slice %115 {offsets = [0, 32], sizes = [8, 32], strides = [1, 1]} : vector<8x128xf32> to vector<8x32xf32>
    %123 = arith.negf %122 : vector<8x32xf32>
    %124 = math.exp %123 : vector<8x32xf32>
    %cst_38 = arith.constant 1.000000e+00 : f32
    %125 = vector.broadcast %cst_38 : f32 to vector<8x32xf32>
    %126 = arith.addf %125, %124 : vector<8x32xf32>
    %127 = arith.divf %125, %126 : vector<8x32xf32>
    %128 = vector.extract_strided_slice %115 {offsets = [0, 64], sizes = [8, 32], strides = [1, 1]} : vector<8x128xf32> to vector<8x32xf32>
    %129 = math.tanh %128 : vector<8x32xf32>
    %130 = vector.extract_strided_slice %115 {offsets = [0, 96], sizes = [8, 32], strides = [1, 1]} : vector<8x128xf32> to vector<8x32xf32>
    %131 = arith.negf %130 : vector<8x32xf32>
    %132 = math.exp %131 : vector<8x32xf32>
    %cst_39 = arith.constant 1.000000e+00 : f32
    %133 = vector.broadcast %cst_39 : f32 to vector<8x32xf32>
    %134 = arith.addf %133, %132 : vector<8x32xf32>
    %135 = arith.divf %133, %134 : vector<8x32xf32>
    %136 = arith.mulf %127, %107 : vector<8x32xf32>
    %137 = arith.mulf %121, %129 : vector<8x32xf32>
    %138 = arith.addf %136, %137 : vector<8x32xf32>
    %139 = math.tanh %138 : vector<8x32xf32>
    %140 = arith.mulf %135, %139 : vector<8x32xf32>
    %c4_i32 = arith.constant 4 : i32
    %c8_i32_40 = arith.constant 8 : i32
    %141 = arith.muli %c4_i32, %c8_i32_40 : i32
    %142 = tpu.assume_multiple %141, 8 : i32
    %143 = arith.index_cast %142 : i32 to index
    %c0_41 = arith.constant 0 : index
    %144 = vector.load %arg9[%143, %c0_41] : memref<64x128xf32, #tpu.memory_space<vmem>>, vector<8x128xf32>
    %cst_42 = arith.constant dense<0.000000e+00> : vector<8x128xf32>
    %145 = tpu.matmul %140, %14, %cst_42 {dimension_numbers = #tpu.dot_dimension_numbers<[1], [0], [0], [1], [0, 0, 1, 1], [], []>} : vector<8x32xf32>, vector<32x128xf32>, vector<8x128xf32> -> vector<8x128xf32>
    %146 = arith.addf %144, %145 : vector<8x128xf32>
    %147 = vector.extract_strided_slice %146 {offsets = [0, 0], sizes = [8, 32], strides = [1, 1]} : vector<8x128xf32> to vector<8x32xf32>
    %148 = arith.negf %147 : vector<8x32xf32>
    %149 = math.exp %148 : vector<8x32xf32>
    %cst_43 = arith.constant 1.000000e+00 : f32
    %150 = vector.broadcast %cst_43 : f32 to vector<8x32xf32>
    %151 = arith.addf %150, %149 : vector<8x32xf32>
    %152 = arith.divf %150, %151 : vector<8x32xf32>
    %153 = vector.extract_strided_slice %146 {offsets = [0, 32], sizes = [8, 32], strides = [1, 1]} : vector<8x128xf32> to vector<8x32xf32>
    %154 = arith.negf %153 : vector<8x32xf32>
    %155 = math.exp %154 : vector<8x32xf32>
    %cst_44 = arith.constant 1.000000e+00 : f32
    %156 = vector.broadcast %cst_44 : f32 to vector<8x32xf32>
    %157 = arith.addf %156, %155 : vector<8x32xf32>
    %158 = arith.divf %156, %157 : vector<8x32xf32>
    %159 = vector.extract_strided_slice %146 {offsets = [0, 64], sizes = [8, 32], strides = [1, 1]} : vector<8x128xf32> to vector<8x32xf32>
    %160 = math.tanh %159 : vector<8x32xf32>
    %161 = vector.extract_strided_slice %146 {offsets = [0, 96], sizes = [8, 32], strides = [1, 1]} : vector<8x128xf32> to vector<8x32xf32>
    %162 = arith.negf %161 : vector<8x32xf32>
    %163 = math.exp %162 : vector<8x32xf32>
    %cst_45 = arith.constant 1.000000e+00 : f32
    %164 = vector.broadcast %cst_45 : f32 to vector<8x32xf32>
    %165 = arith.addf %164, %163 : vector<8x32xf32>
    %166 = arith.divf %164, %165 : vector<8x32xf32>
    %167 = arith.mulf %158, %138 : vector<8x32xf32>
    %168 = arith.mulf %152, %160 : vector<8x32xf32>
    %169 = arith.addf %167, %168 : vector<8x32xf32>
    %170 = math.tanh %169 : vector<8x32xf32>
    %171 = arith.mulf %166, %170 : vector<8x32xf32>
    %c5_i32 = arith.constant 5 : i32
    %c8_i32_46 = arith.constant 8 : i32
    %172 = arith.muli %c5_i32, %c8_i32_46 : i32
    %173 = tpu.assume_multiple %172, 8 : i32
    %174 = arith.index_cast %173 : i32 to index
    %c0_47 = arith.constant 0 : index
    %175 = vector.load %arg9[%174, %c0_47] : memref<64x128xf32, #tpu.memory_space<vmem>>, vector<8x128xf32>
    %cst_48 = arith.constant dense<0.000000e+00> : vector<8x128xf32>
    %176 = tpu.matmul %171, %14, %cst_48 {dimension_numbers = #tpu.dot_dimension_numbers<[1], [0], [0], [1], [0, 0, 1, 1], [], []>} : vector<8x32xf32>, vector<32x128xf32>, vector<8x128xf32> -> vector<8x128xf32>
    %177 = arith.addf %175, %176 : vector<8x128xf32>
    %178 = vector.extract_strided_slice %177 {offsets = [0, 0], sizes = [8, 32], strides = [1, 1]} : vector<8x128xf32> to vector<8x32xf32>
    %179 = arith.negf %178 : vector<8x32xf32>
    %180 = math.exp %179 : vector<8x32xf32>
    %cst_49 = arith.constant 1.000000e+00 : f32
    %181 = vector.broadcast %cst_49 : f32 to vector<8x32xf32>
    %182 = arith.addf %181, %180 : vector<8x32xf32>
    %183 = arith.divf %181, %182 : vector<8x32xf32>
    %184 = vector.extract_strided_slice %177 {offsets = [0, 32], sizes = [8, 32], strides = [1, 1]} : vector<8x128xf32> to vector<8x32xf32>
    %185 = arith.negf %184 : vector<8x32xf32>
    %186 = math.exp %185 : vector<8x32xf32>
    %cst_50 = arith.constant 1.000000e+00 : f32
    %187 = vector.broadcast %cst_50 : f32 to vector<8x32xf32>
    %188 = arith.addf %187, %186 : vector<8x32xf32>
    %189 = arith.divf %187, %188 : vector<8x32xf32>
    %190 = vector.extract_strided_slice %177 {offsets = [0, 64], sizes = [8, 32], strides = [1, 1]} : vector<8x128xf32> to vector<8x32xf32>
    %191 = math.tanh %190 : vector<8x32xf32>
    %192 = vector.extract_strided_slice %177 {offsets = [0, 96], sizes = [8, 32], strides = [1, 1]} : vector<8x128xf32> to vector<8x32xf32>
    %193 = arith.negf %192 : vector<8x32xf32>
    %194 = math.exp %193 : vector<8x32xf32>
    %cst_51 = arith.constant 1.000000e+00 : f32
    %195 = vector.broadcast %cst_51 : f32 to vector<8x32xf32>
    %196 = arith.addf %195, %194 : vector<8x32xf32>
    %197 = arith.divf %195, %196 : vector<8x32xf32>
    %198 = arith.mulf %189, %169 : vector<8x32xf32>
    %199 = arith.mulf %183, %191 : vector<8x32xf32>
    %200 = arith.addf %198, %199 : vector<8x32xf32>
    %201 = math.tanh %200 : vector<8x32xf32>
    %202 = arith.mulf %197, %201 : vector<8x32xf32>
    %c6_i32 = arith.constant 6 : i32
    %c8_i32_52 = arith.constant 8 : i32
    %203 = arith.muli %c6_i32, %c8_i32_52 : i32
    %204 = tpu.assume_multiple %203, 8 : i32
    %205 = arith.index_cast %204 : i32 to index
    %c0_53 = arith.constant 0 : index
    %206 = vector.load %arg9[%205, %c0_53] : memref<64x128xf32, #tpu.memory_space<vmem>>, vector<8x128xf32>
    %cst_54 = arith.constant dense<0.000000e+00> : vector<8x128xf32>
    %207 = tpu.matmul %202, %14, %cst_54 {dimension_numbers = #tpu.dot_dimension_numbers<[1], [0], [0], [1], [0, 0, 1, 1], [], []>} : vector<8x32xf32>, vector<32x128xf32>, vector<8x128xf32> -> vector<8x128xf32>
    %208 = arith.addf %206, %207 : vector<8x128xf32>
    %209 = vector.extract_strided_slice %208 {offsets = [0, 0], sizes = [8, 32], strides = [1, 1]} : vector<8x128xf32> to vector<8x32xf32>
    %210 = arith.negf %209 : vector<8x32xf32>
    %211 = math.exp %210 : vector<8x32xf32>
    %cst_55 = arith.constant 1.000000e+00 : f32
    %212 = vector.broadcast %cst_55 : f32 to vector<8x32xf32>
    %213 = arith.addf %212, %211 : vector<8x32xf32>
    %214 = arith.divf %212, %213 : vector<8x32xf32>
    %215 = vector.extract_strided_slice %208 {offsets = [0, 32], sizes = [8, 32], strides = [1, 1]} : vector<8x128xf32> to vector<8x32xf32>
    %216 = arith.negf %215 : vector<8x32xf32>
    %217 = math.exp %216 : vector<8x32xf32>
    %cst_56 = arith.constant 1.000000e+00 : f32
    %218 = vector.broadcast %cst_56 : f32 to vector<8x32xf32>
    %219 = arith.addf %218, %217 : vector<8x32xf32>
    %220 = arith.divf %218, %219 : vector<8x32xf32>
    %221 = vector.extract_strided_slice %208 {offsets = [0, 64], sizes = [8, 32], strides = [1, 1]} : vector<8x128xf32> to vector<8x32xf32>
    %222 = math.tanh %221 : vector<8x32xf32>
    %223 = vector.extract_strided_slice %208 {offsets = [0, 96], sizes = [8, 32], strides = [1, 1]} : vector<8x128xf32> to vector<8x32xf32>
    %224 = arith.negf %223 : vector<8x32xf32>
    %225 = math.exp %224 : vector<8x32xf32>
    %cst_57 = arith.constant 1.000000e+00 : f32
    %226 = vector.broadcast %cst_57 : f32 to vector<8x32xf32>
    %227 = arith.addf %226, %225 : vector<8x32xf32>
    %228 = arith.divf %226, %227 : vector<8x32xf32>
    %229 = arith.mulf %220, %200 : vector<8x32xf32>
    %230 = arith.mulf %214, %222 : vector<8x32xf32>
    %231 = arith.addf %229, %230 : vector<8x32xf32>
    %232 = math.tanh %231 : vector<8x32xf32>
    %233 = arith.mulf %228, %232 : vector<8x32xf32>
    %c7_i32 = arith.constant 7 : i32
    %c8_i32_58 = arith.constant 8 : i32
    %234 = arith.muli %c7_i32, %c8_i32_58 : i32
    %235 = tpu.assume_multiple %234, 8 : i32
    %236 = arith.index_cast %235 : i32 to index
    %c0_59 = arith.constant 0 : index
    %237 = vector.load %arg9[%236, %c0_59] : memref<64x128xf32, #tpu.memory_space<vmem>>, vector<8x128xf32>
    %cst_60 = arith.constant dense<0.000000e+00> : vector<8x128xf32>
    %238 = tpu.matmul %233, %14, %cst_60 {dimension_numbers = #tpu.dot_dimension_numbers<[1], [0], [0], [1], [0, 0, 1, 1], [], []>} : vector<8x32xf32>, vector<32x128xf32>, vector<8x128xf32> -> vector<8x128xf32>
    %239 = arith.addf %237, %238 : vector<8x128xf32>
    %240 = vector.extract_strided_slice %239 {offsets = [0, 0], sizes = [8, 32], strides = [1, 1]} : vector<8x128xf32> to vector<8x32xf32>
    %241 = arith.negf %240 : vector<8x32xf32>
    %242 = math.exp %241 : vector<8x32xf32>
    %cst_61 = arith.constant 1.000000e+00 : f32
    %243 = vector.broadcast %cst_61 : f32 to vector<8x32xf32>
    %244 = arith.addf %243, %242 : vector<8x32xf32>
    %245 = arith.divf %243, %244 : vector<8x32xf32>
    %246 = vector.extract_strided_slice %239 {offsets = [0, 32], sizes = [8, 32], strides = [1, 1]} : vector<8x128xf32> to vector<8x32xf32>
    %247 = arith.negf %246 : vector<8x32xf32>
    %248 = math.exp %247 : vector<8x32xf32>
    %cst_62 = arith.constant 1.000000e+00 : f32
    %249 = vector.broadcast %cst_62 : f32 to vector<8x32xf32>
    %250 = arith.addf %249, %248 : vector<8x32xf32>
    %251 = arith.divf %249, %250 : vector<8x32xf32>
    %252 = vector.extract_strided_slice %239 {offsets = [0, 64], sizes = [8, 32], strides = [1, 1]} : vector<8x128xf32> to vector<8x32xf32>
    %253 = math.tanh %252 : vector<8x32xf32>
    %254 = vector.extract_strided_slice %239 {offsets = [0, 96], sizes = [8, 32], strides = [1, 1]} : vector<8x128xf32> to vector<8x32xf32>
    %255 = arith.negf %254 : vector<8x32xf32>
    %256 = math.exp %255 : vector<8x32xf32>
    %cst_63 = arith.constant 1.000000e+00 : f32
    %257 = vector.broadcast %cst_63 : f32 to vector<8x32xf32>
    %258 = arith.addf %257, %256 : vector<8x32xf32>
    %259 = arith.divf %257, %258 : vector<8x32xf32>
    %260 = arith.mulf %251, %231 : vector<8x32xf32>
    %261 = arith.mulf %245, %253 : vector<8x32xf32>
    %262 = arith.addf %260, %261 : vector<8x32xf32>
    %263 = math.tanh %262 : vector<8x32xf32>
    %264 = arith.mulf %259, %263 : vector<8x32xf32>
    %c8_i32_64 = arith.constant 8 : i32
    %265 = math.tanh %264 : vector<8x32xf32>
    %c0_65 = arith.constant 0 : index
    %c0_66 = arith.constant 0 : index
    %266 = vector.load %arg6[%c0_65, %c0_66] : memref<32x4xf32, #tpu.memory_space<vmem>>, vector<32x4xf32>
    %cst_67 = arith.constant dense<0.000000e+00> : vector<8x4xf32>
    %267 = tpu.matmul %265, %266, %cst_67 {dimension_numbers = #tpu.dot_dimension_numbers<[1], [0], [0], [1], [0, 0, 1, 1], [], []>} : vector<8x32xf32>, vector<32x4xf32>, vector<8x4xf32> -> vector<8x4xf32>
    %c0_68 = arith.constant 0 : index
    %c0_69 = arith.constant 0 : index
    %268 = vector.load %arg7[%c0_68, %c0_69] : memref<1x4xf32, #tpu.memory_space<vmem>>, vector<1x4xf32>
    %269 = vector.broadcast %268 : vector<1x4xf32> to vector<8x4xf32>
    %270 = arith.addf %267, %269 : vector<8x4xf32>
    %c0_70 = arith.constant 0 : index
    %c0_71 = arith.constant 0 : index
    %271 = vector.load %arg8[%c0_70, %c0_71] : memref<8x4xf32, #tpu.memory_space<vmem>>, vector<8x4xf32>
    tpu.vector_store %arg8[%c0_70, %c0_71], %270 {strides = array<i32>} : memref<8x4xf32, #tpu.memory_space<vmem>>, vector<8x4xf32>,
    return
  }
}

</mosaic_0001>

<llo_original>
// kernel: tpu_custom_call.1
$region0: #{tpu_custom_call.1}
  #allocation0 [shape = 'u32[]', space=smem, size = 0x4, offset = 0x4, fixed_abs, tag = 'smem constant byte address 0x4 - core index']
  #allocation1 [shape = 'u32[144,128]{1,0:T(1,128)}', space=vmem, size = 0x12000, scoped, tag = 'internal scratch']
  #allocation2 [shape = 'f32[64,128]{1,0:T(8,128)}', space=vmem, size = 0x8000, scoped, tag = 'scratch operand']
  %s0 = inlined_call_operand.vmem [shape: f32[64,8], index: 0, kind: input, shape index: {}]
  %s1 = inlined_call_operand.vmem [shape: f32[8,32], index: 1, kind: input, shape index: {}]
  %s2 = inlined_call_operand.vmem [shape: f32[1,32], index: 2, kind: input, shape index: {}]
  %s3 = inlined_call_operand.vmem [shape: f32[32,128], index: 3, kind: input, shape index: {}]
  %s4 = inlined_call_operand.vmem [shape: f32[32,128], index: 4, kind: input, shape index: {}]
  %s5 = inlined_call_operand.vmem [shape: f32[1,128], index: 5, kind: input, shape index: {}]
  %s6 = inlined_call_operand.vmem [shape: f32[32,4], index: 6, kind: input, shape index: {}]
  %s7 = inlined_call_operand.vmem [shape: f32[1,4], index: 7, kind: input, shape index: {}]
  %s8 = inlined_call_operand.vmem [shape: f32[8,4], index: 8, kind: output, shape index: {}]
  %s9 = sld [smem:[#allocation0]]
  $region42: #{tpu_custom_call.1} parent=0
    _
  %s11 = ssub.s32 1, %s9
  %s12 = scalar_select 0, %s11, %s9
  // Predicated region
  $region2: #{tpu_custom_call.1} parent=0 // pred_check
    _
  $region3: #{tpu_custom_call.1} parent=0 // pred_check_branch
    %14 = sbr.rel (0) target = $region5
  $region4: #{tpu_custom_call.1} parent=0 // pred_region
    _
  $region5: #{tpu_custom_call.1} parent=0 // pred_fallthru
    _
  // Predicated region
  $region6: #{tpu_custom_call.1} parent=0 // pred_check
    _
  $region7: #{tpu_custom_call.1} parent=0 // pred_check_branch
    %16 = sbr.rel (0) target = $region9
  $region8: #{tpu_custom_call.1} parent=0 // pred_region
    _
  $region9: #{tpu_custom_call.1} parent=0 // pred_fallthru
    _
  // Predicated region
  $region10: #{tpu_custom_call.1} parent=0 // pred_check
    _
  $region11: #{tpu_custom_call.1} parent=0 // pred_check_branch
    %18 = sbr.rel (0) target = $region13
  $region12: #{tpu_custom_call.1} parent=0 // pred_region
    _
  $region13: #{tpu_custom_call.1} parent=0 // pred_fallthru
    _
  // Predicated region
  $region14: #{tpu_custom_call.1} parent=0 // pred_check
    _
  $region15: #{tpu_custom_call.1} parent=0 // pred_check_branch
    %20 = sbr.rel (0) target = $region17
  $region16: #{tpu_custom_call.1} parent=0 // pred_region
    _
  $region17: #{tpu_custom_call.1} parent=0 // pred_fallthru
    _
  // Predicated region
  $region18: #{tpu_custom_call.1} parent=0 // pred_check
    _
  $region19: #{tpu_custom_call.1} parent=0 // pred_check_branch
    %22 = sbr.rel (0) target = $region21
  $region20: #{tpu_custom_call.1} parent=0 // pred_region
    _
  $region21: #{tpu_custom_call.1} parent=0 // pred_fallthru
    _
  // Predicated region
  $region22: #{tpu_custom_call.1} parent=0 // pred_check
    _
  $region23: #{tpu_custom_call.1} parent=0 // pred_check_branch
    %24 = sbr.rel (0) target = $region25
  $region24: #{tpu_custom_call.1} parent=0 // pred_region
    _
  $region25: #{tpu_custom_call.1} parent=0 // pred_fallthru
    _
  // Predicated region
  $region26: #{tpu_custom_call.1} parent=0 // pred_check
    _
  $region27: #{tpu_custom_call.1} parent=0 // pred_check_branch
    %26 = sbr.rel (0) target = $region29
  $region28: #{tpu_custom_call.1} parent=0 // pred_region
    _
  $region29: #{tpu_custom_call.1} parent=0 // pred_fallthru
    _
  // Predicated region
  $region30: #{tpu_custom_call.1} parent=0 // pred_check
    _
  $region31: #{tpu_custom_call.1} parent=0 // pred_check_branch
    %28 = sbr.rel (0) target = $region33
  $region32: #{tpu_custom_call.1} parent=0 // pred_region
    _
  $region33: #{tpu_custom_call.1} parent=0 // pred_fallthru
    _
  %v29 = vld [vmem:[%s0] sm:$0xff]
  %v30 = vld [vmem:[%s0 + $0x8] sm:$0xff]
  %v31 = vld [vmem:[%s0 + $0x10] sm:$0xff]
  %v32 = vld [vmem:[%s0 + $0x18] sm:$0xff]
  %v33 = vld [vmem:[%s0 + $0x20] sm:$0xff]
  %v34 = vld [vmem:[%s0 + $0x28] sm:$0xff]
  %v35 = vld [vmem:[%s0 + $0x30] sm:$0xff]
  %v36 = vld [vmem:[%s0 + $0x38] sm:$0xff]
  %v37 = vld [vmem:[%s1] sm:$0xff]
  %v38 = vld [vmem:[%s2] sm:$0x1]
  %v40 = vlaneseq
  %v41 = vshrl.u32 %v40, 7
  %v42 = vsub.s32 0, %v41
  %v43 = vrot.slane %v38, %v42
  %vm45 = vcmask 64512
  %v47 = vsel %vm45, %v29, 0
  %v50 = vsel %vm45, %v30, 0
  %v53 = vsel %vm45, %v31, 0
  %v56 = vsel %vm45, %v32, 0
  %v59 = vsel %vm45, %v33, 0
  %v62 = vsel %vm45, %v34, 0
  %v65 = vsel %vm45, %v35, 0
  %v68 = vsel %vm45, %v36, 0
  %70 = vmatprep.subr.mxu0 0.0
  %71 = vmatpush1.msra.mxu0 %v37
  %72 = vmatprep.subr.mxu0 0.0
  %73 = vmatpush1.msra.mxu0 0.0
  %74 = vmatprep.subr.mxu0 0.0
  %75 = vmatpush1.msra.mxu0 0.0
  %76 = vmatprep.subr.mxu0 0.0
  %77 = vmatpush1.msra.mxu0 0.0
  %78 = vmatprep.subr.mxu0 0.0
  %79 = vmatpush1.msra.mxu0 0.0
  %80 = vmatprep.subr.mxu0 0.0
  %81 = vmatpush1.msra.mxu0 0.0
  %82 = vmatprep.subr.mxu0 0.0
  %83 = vmatpush1.msra.mxu0 0.0
  %84 = vmatprep.subr.mxu0 0.0
  %85 = vmatpush1.msra.mxu0 0.0
  %86 = vmatprep.subr.mxu0 0.0
  %87 = vmatpush1.msra.mxu0 0.0
  %88 = vmatprep.subr.mxu0 0.0
  %89 = vmatpush1.msra.mxu0 0.0
  %90 = vmatprep.subr.mxu0 0.0
  %91 = vmatpush1.msra.mxu0 0.0
  %92 = vmatprep.subr.mxu0 0.0
  %93 = vmatpush1.msra.mxu0 0.0
  %94 = vmatprep.subr.mxu0 0.0
  %95 = vmatpush1.msra.mxu0 0.0
  %96 = vmatprep.subr.mxu0 0.0
  %97 = vmatpush1.msra.mxu0 0.0
  %98 = vmatprep.subr.mxu0 0.0
  %99 = vmatpush1.msra.mxu0 0.0
  %100 = vmatprep.subr.mxu0 0.0
  %101 = vmatpush1.msra.mxu0 0.0
  %102 = vmatprep.subr.mxu0 0.0
  %103 = vmatpush1.msra.mxu0 0.0
  %104 = vmatprep.subr.mxu0 0.0
  %105 = vmatpush1.msra.mxu0 0.0
  %106 = vmatprep.subr.mxu0 0.0
  %107 = vmatpush1.msra.mxu0 0.0
  %108 = vmatprep.subr.mxu0 0.0
  %109 = vmatpush1.msra.mxu0 0.0
  %110 = vmatprep.subr.mxu0 0.0
  %111 = vmatpush1.msra.mxu0 0.0
  %112 = vmatprep.subr.mxu0 0.0
  %113 = vmatpush1.msra.mxu0 0.0
  %114 = vmatprep.subr.mxu0 0.0
  %115 = vmatpush1.msra.mxu0 0.0
  %116 = vmatprep.subr.mxu0 0.0
  %117 = vmatpush1.msra.mxu0 0.0
  %118 = vmatprep.subr.mxu0 0.0
  %119 = vmatpush1.msra.mxu0 0.0
  %120 = vmatprep.subr.mxu0 0.0
  %121 = vmatpush1.msra.mxu0 0.0
  %122 = vmatprep.subr.mxu0 0.0
  %123 = vmatpush1.msra.mxu0 0.0
  %124 = vmatprep.subr.mxu0 0.0
  %125 = vmatpush1.msra.mxu0 0.0
  %126 = vmatprep.subr.mxu0 0.0
  %127 = vmatpush1.msra.mxu0 0.0
  %128 = vmatprep.subr.mxu0 0.0
  %129 = vmatpush1.msra.mxu0 0.0
  %130 = vmatprep.subr.mxu0 0.0
  %131 = vmatpush1.msra.mxu0 0.0
  %132 = vmatprep.subr.mxu0 0.0
  %133 = vmatpush1.msra.mxu0 0.0
  %134 = vmatprep.mubr.f32.mxu0 0.0
  %135 = vmatmul.mubr.f32.gmra.mrb[0].mxu0 %v47
  %v136 = vpop.f32.mrb[0].mxu0
  %v137 = vadd.f32 %v43, %v136
  %v138 = vpop.f32.mrb[0].mxu0
  %139 = vmatprep.mubr.f32.mxu0 0.0
  %140 = vmatmul.mubr.f32.gmra.mrb[0].mxu0 %v50
  %v141 = vpop.f32.mrb[0].mxu0
  %v142 = vadd.f32 %v43, %v141
  %v143 = vpop.f32.mrb[0].mxu0
  %144 = vmatprep.mubr.f32.mxu0 0.0
  %145 = vmatmul.mubr.f32.gmra.mrb[0].mxu0 %v53
  %v146 = vpop.f32.mrb[0].mxu0
  %v147 = vadd.f32 %v43, %v146
  %v148 = vpop.f32.mrb[0].mxu0
  %149 = vmatprep.mubr.f32.mxu0 0.0
  %150 = vmatmul.mubr.f32.gmra.mrb[0].mxu0 %v56
  %v151 = vpop.f32.mrb[0].mxu0
  %v152 = vadd.f32 %v43, %v151
  %v153 = vpop.f32.mrb[0].mxu0
  %154 = vmatprep.mubr.f32.mxu0 0.0
  %155 = vmatmul.mubr.f32.gmra.mrb[0].mxu0 %v59
  %v156 = vpop.f32.mrb[0].mxu0
  %v157 = vadd.f32 %v43, %v156
  %v158 = vpop.f32.mrb[0].mxu0
  %159 = vmatprep.mubr.f32.mxu0 0.0
  %160 = vmatmul.mubr.f32.gmra.mrb[0].mxu0 %v62
  %v161 = vpop.f32.mrb[0].mxu0
  %v162 = vadd.f32 %v43, %v161
  %v163 = vpop.f32.mrb[0].mxu0
  %164 = vmatprep.mubr.f32.mxu0 0.0
  %165 = vmatmul.mubr.f32.gmra.mrb[0].mxu0 %v65
  %v166 = vpop.f32.mrb[0].mxu0
  %v167 = vadd.f32 %v43, %v166
  %v168 = vpop.f32.mrb[0].mxu0
  %169 = vmatprep.mubr.f32.mxu0 0.0
  %170 = vmatmul.mubr.f32.gmra.mrb[0].mxu0 %v68
  %v171 = vpop.f32.mrb[0].mxu0
  %v172 = vadd.f32 %v43, %v171
  %v173 = vpop.f32.mrb[0].mxu0
  %174 = vdwg.mxu0
  %v175 = vmax.f32 %v137, 0.0
  %v176 = vmax.f32 %v142, 0.0
  %v177 = vmax.f32 %v147, 0.0
  %v178 = vmax.f32 %v152, 0.0
  %v179 = vmax.f32 %v157, 0.0
  %v180 = vmax.f32 %v162, 0.0
  %v181 = vmax.f32 %v167, 0.0
  %v182 = vmax.f32 %v172, 0.0
  %v183 = vld [vmem:[%s3] sm:$0xff]
  %v184 = vld [vmem:[%s3 + $0x8] sm:$0xff]
  %v185 = vld [vmem:[%s3 + $0x10] sm:$0xff]
  %v186 = vld [vmem:[%s3 + $0x18] sm:$0xff]
  %v187 = vld [vmem:[%s5] sm:$0x1]
  %v189 = vlaneseq
  %v190 = vshrl.u32 %v189, 7
  %v191 = vsub.s32 0, %v190
  %v192 = vrot.slane %v187, %v191
  %vm194 = vcmask 261120
  %v196 = vsel %vm194, %v175, 0
  %v199 = vsel %vm194, %v176, 0
  %v202 = vsel %vm194, %v177, 0
  %v205 = vsel %vm194, %v178, 0
  %v208 = vsel %vm194, %v179, 0
  %v211 = vsel %vm194, %v180, 0
  %v214 = vsel %vm194, %v181, 0
  %v217 = vsel %vm194, %v182, 0
  %219 = vmatprep.subr.mxu0 0.0
  %220 = vmatpush1.msra.mxu0 %v183
  %221 = vmatprep.subr.mxu0 0.0
  %222 = vmatpush1.msra.mxu0 %v184
  %223 = vmatprep.subr.mxu0 0.0
  %224 = vmatpush1.msra.mxu0 %v185
  %225 = vmatprep.subr.mxu0 0.0
  %226 = vmatpush1.msra.mxu0 %v186
  %227 = vmatprep.subr.mxu0 0.0
  %228 = vmatpush1.msra.mxu0 0.0
  %229 = vmatprep.subr.mxu0 0.0
  %230 = vmatpush1.msra.mxu0 0.0
  %231 = vmatprep.subr.mxu0 0.0
  %232 = vmatpush1.msra.mxu0 0.0
  %233 = vmatprep.subr.mxu0 0.0
  %234 = vmatpush1.msra.mxu0 0.0
  %235 = vmatprep.subr.mxu0 0.0
  %236 = vmatpush1.msra.mxu0 0.0
  %237 = vmatprep.subr.mxu0 0.0
  %238 = vmatpush1.msra.mxu0 0.0
  %239 = vmatprep.subr.mxu0 0.0
  %240 = vmatpush1.msra.mxu0 0.0
  %241 = vmatprep.subr.mxu0 0.0
  %242 = vmatpush1.msra.mxu0 0.0
  %243 = vmatprep.subr.mxu0 0.0
  %244 = vmatpush1.msra.mxu0 0.0
  %245 = vmatprep.subr.mxu0 0.0
  %246 = vmatpush1.msra.mxu0 0.0
  %247 = vmatprep.subr.mxu0 0.0
  %248 = vmatpush1.msra.mxu0 0.0
  %249 = vmatprep.subr.mxu0 0.0
  %250 = vmatpush1.msra.mxu0 0.0
  %251 = vmatprep.subr.mxu0 0.0
  %252 = vmatpush1.msra.mxu0 0.0
  %253 = vmatprep.subr.mxu0 0.0
  %254 = vmatpush1.msra.mxu0 0.0
  %255 = vmatprep.subr.mxu0 0.0
  %256 = vmatpush1.msra.mxu0 0.0
  %257 = vmatprep.subr.mxu0 0.0
  %258 = vmatpush1.msra.mxu0 0.0
  %259 = vmatprep.subr.mxu0 0.0
  %260 = vmatpush1.msra.mxu0 0.0
  %261 = vmatprep.subr.mxu0 0.0
  %262 = vmatpush1.msra.mxu0 0.0
  %263 = vmatprep.subr.mxu0 0.0
  %264 = vmatpush1.msra.mxu0 0.0
  %265 = vmatprep.subr.mxu0 0.0
  %266 = vmatpush1.msra.mxu0 0.0
  %267 = vmatprep.subr.mxu0 0.0
  %268 = vmatpush1.msra.mxu0 0.0
  %269 = vmatprep.subr.mxu0 0.0
  %270 = vmatpush1.msra.mxu0 0.0
  %271 = vmatprep.subr.mxu0 0.0
  %272 = vmatpush1.msra.mxu0 0.0
  %273 = vmatprep.subr.mxu0 0.0
  %274 = vmatpush1.msra.mxu0 0.0
  %275 = vmatprep.subr.mxu0 0.0
  %276 = vmatpush1.msra.mxu0 0.0
  %277 = vmatprep.subr.mxu0 0.0
  %278 = vmatpush1.msra.mxu0 0.0
  %279 = vmatprep.subr.mxu0 0.0
  %280 = vmatpush1.msra.mxu0 0.0
  %281 = vmatprep.subr.mxu0 0.0
  %282 = vmatpush1.msra.mxu0 0.0
  %283 = vmatprep.mubr.f32.mxu0 0.0
  %284 = vmatmul.mubr.f32.gmra.mrb[0].mxu0 %v196
  %v285 = vpop.f32.mrb[0].mxu0
  %v286 = vadd.f32 %v192, %v285
  %v287 = vpop.f32.mrb[0].mxu0
  %288 = vmatprep.mubr.f32.mxu0 0.0
  %289 = vmatmul.mubr.f32.gmra.mrb[0].mxu0 %v199
  %v290 = vpop.f32.mrb[0].mxu0
  %v291 = vadd.f32 %v192, %v290
  %v292 = vpop.f32.mrb[0].mxu0
  %293 = vmatprep.mubr.f32.mxu0 0.0
  %294 = vmatmul.mubr.f32.gmra.mrb[0].mxu0 %v202
  %v295 = vpop.f32.mrb[0].mxu0
  %v296 = vadd.f32 %v192, %v295
  %v297 = vpop.f32.mrb[0].mxu0
  %298 = vmatprep.mubr.f32.mxu0 0.0
  %299 = vmatmul.mubr.f32.gmra.mrb[0].mxu0 %v205
  %v300 = vpop.f32.mrb[0].mxu0
  %v301 = vadd.f32 %v192, %v300
  %v302 = vpop.f32.mrb[0].mxu0
  %303 = vmatprep.mubr.f32.mxu0 0.0
  %304 = vmatmul.mubr.f32.gmra.mrb[0].mxu0 %v208
  %v305 = vpop.f32.mrb[0].mxu0
  %v306 = vadd.f32 %v192, %v305
  %v307 = vpop.f32.mrb[0].mxu0
  %308 = vmatprep.mubr.f32.mxu0 0.0
  %309 = vmatmul.mubr.f32.gmra.mrb[0].mxu0 %v211
  %v310 = vpop.f32.mrb[0].mxu0
  %v311 = vadd.f32 %v192, %v310
  %v312 = vpop.f32.mrb[0].mxu0
  %313 = vmatprep.mubr.f32.mxu0 0.0
  %314 = vmatmul.mubr.f32.gmra.mrb[0].mxu0 %v214
  %v315 = vpop.f32.mrb[0].mxu0
  %v316 = vadd.f32 %v192, %v315
  %v317 = vpop.f32.mrb[0].mxu0
  %318 = vmatprep.mubr.f32.mxu0 0.0
  %319 = vmatmul.mubr.f32.gmra.mrb[0].mxu0 %v217
  %v320 = vpop.f32.mrb[0].mxu0
  %v321 = vadd.f32 %v192, %v320
  %v322 = vpop.f32.mrb[0].mxu0
  %323 = vdwg.mxu0
  %324 = vst [vmem:[#allocation2] sm:$0xff] %v286
  %325 = vst [vmem:[#allocation2 + $0x8] sm:$0xff] %v291
  %326 = vst [vmem:[#allocation2 + $0x10] sm:$0xff] %v296
  %327 = vst [vmem:[#allocation2 + $0x18] sm:$0xff] %v301
  %328 = vst [vmem:[#allocation2 + $0x20] sm:$0xff] %v306
  %329 = vst [vmem:[#allocation2 + $0x28] sm:$0xff] %v311
  %330 = vst [vmem:[#allocation2 + $0x30] sm:$0xff] %v316
  %331 = vst [vmem:[#allocation2 + $0x38] sm:$0xff] %v321
  %v332 = vld [vmem:[%s4] sm:$0xff]
  %v333 = vld [vmem:[%s4 + $0x8] sm:$0xff]
  %v334 = vld [vmem:[%s4 + $0x10] sm:$0xff]
  %v335 = vld [vmem:[%s4 + $0x18] sm:$0xff]
  %v336 = vld [vmem:[#allocation2] sm:$0xff]
  %v338 = vsel %vm194, 0.0, 0
  %340 = vmatprep.subr.mxu0 0.0
  %341 = vmatpush1.msra.mxu0 %v332
  %342 = vmatprep.subr.mxu0 0.0
  %343 = vmatpush1.msra.mxu0 %v333
  %344 = vmatprep.subr.mxu0 0.0
  %345 = vmatpush1.msra.mxu0 %v334
  %346 = vmatprep.subr.mxu0 0.0
  %347 = vmatpush1.msra.mxu0 %v335
  %348 = vmatprep.subr.mxu0 0.0
  %349 = vmatpush1.msra.mxu0 0.0
  %350 = vmatprep.subr.mxu0 0.0
  %351 = vmatpush1.msra.mxu0 0.0
  %352 = vmatprep.subr.mxu0 0.0
  %353 = vmatpush1.msra.mxu0 0.0
  %354 = vmatprep.subr.mxu0 0.0
  %355 = vmatpush1.msra.mxu0 0.0
  %356 = vmatprep.subr.mxu0 0.0
  %357 = vmatpush1.msra.mxu0 0.0
  %358 = vmatprep.subr.mxu0 0.0
  %359 = vmatpush1.msra.mxu0 0.0
  %360 = vmatprep.subr.mxu0 0.0
  %361 = vmatpush1.msra.mxu0 0.0
  %362 = vmatprep.subr.mxu0 0.0
  %363 = vmatpush1.msra.mxu0 0.0
  %364 = vmatprep.subr.mxu0 0.0
  %365 = vmatpush1.msra.mxu0 0.0
  %366 = vmatprep.subr.mxu0 0.0
  %367 = vmatpush1.msra.mxu0 0.0
  %368 = vmatprep.subr.mxu0 0.0
  %369 = vmatpush1.msra.mxu0 0.0
  %370 = vmatprep.subr.mxu0 0.0
  %371 = vmatpush1.msra.mxu0 0.0
  %372 = vmatprep.subr.mxu0 0.0
  %373 = vmatpush1.msra.mxu0 0.0
  %374 = vmatprep.subr.mxu0 0.0
  %375 = vmatpush1.msra.mxu0 0.0
  %376 = vmatprep.subr.mxu0 0.0
  %377 = vmatpush1.msra.mxu0 0.0
  %378 = vmatprep.subr.mxu0 0.0
  %379 = vmatpush1.msra.mxu0 0.0
  %380 = vmatprep.subr.mxu0 0.0
  %381 = vmatpush1.msra.mxu0 0.0
  %382 = vmatprep.subr.mxu0 0.0
  %383 = vmatpush1.msra.mxu0 0.0
  %384 = vmatprep.subr.mxu0 0.0
  %385 = vmatpush1.msra.mxu0 0.0
  %386 = vmatprep.subr.mxu0 0.0
  %387 = vmatpush1.msra.mxu0 0.0
  %388 = vmatprep.subr.mxu0 0.0
  %389 = vmatpush1.msra.mxu0 0.0
  %390 = vmatprep.subr.mxu0 0.0
  %391 = vmatpush1.msra.mxu0 0.0
  %392 = vmatprep.subr.mxu0 0.0
  %393 = vmatpush1.msra.mxu0 0.0
  %394 = vmatprep.subr.mxu0 0.0
  %395 = vmatpush1.msra.mxu0 0.0
  %396 = vmatprep.subr.mxu0 0.0
  %397 = vmatpush1.msra.mxu0 0.0
  %398 = vmatprep.subr.mxu0 0.0
  %399 = vmatpush1.msra.mxu0 0.0
  %400 = vmatprep.subr.mxu0 0.0
  %401 = vmatpush1.msra.mxu0 0.0
  %402 = vmatprep.subr.mxu0 0.0
  %403 = vmatpush1.msra.mxu0 0.0
  %404 = vmatprep.mubr.f32.mxu0 0.0
  %405 = vmatmul.mubr.f32.gmra.mrb[0].mxu0 %v338
  %v406 = vpop.f32.mrb[0].mxu0
  %v407 = vadd.f32 0.0, %v406
  %v408 = vpop.f32.mrb[0].mxu0
  %409 = vdwg.mxu0
  %v410 = vadd.f32 %v336, %v407
  %v411 = vxor.u32 %v410, 2147483648
  %v412 = vmul.f32 %v411, 1.442695
  %v413 = vpow.pop %v412
  %v414 = vadd.f32 %v413, 1.0
  %v415 = vrcp.pop %v414
  %v416 = vmul.f32 1.0, %v415
  %v417 = vtanh.pop %v410
  %v418 = vmul.f32 %v416, 0.0
  %420 = vrot.lane.b32.xlu0 %v417, 64
  %v421 = vpop.permute.xlu0 %420
  %v423 = vmul.f32 %v416, %v421
  %425 = vrot.lane.b32.xlu0 %v423, 32
  %v426 = vpop.permute.xlu0 %425
  %v428 = vadd.f32 %v418, %v426
  %v429 = vtanh.pop %v428
  %431 = vrot.lane.b32.xlu0 %v429, 64
  %v432 = vpop.permute.xlu0 %431
  %v434 = vmul.f32 %v416, %v432
  %s435 = scalar_lea.vmem [#allocation2], 8
  %v436 = vld [vmem:[%s435] sm:$0xff]
  %438 = vrot.lane.b32.xlu0 %v434, 32
  %v439 = vpop.permute.xlu0 %438
  %v440 = vsel %vm194, %v439, 0
  %442 = vmatprep.subr.mxu0 0.0
  %443 = vmatpush1.msra.mxu0 %v332
  %444 = vmatprep.subr.mxu0 0.0
  %445 = vmatpush1.msra.mxu0 %v333
  %446 = vmatprep.subr.mxu0 0.0
  %447 = vmatpush1.msra.mxu0 %v334
  %448 = vmatprep.subr.mxu0 0.0
  %449 = vmatpush1.msra.mxu0 %v335
  %450 = vmatprep.subr.mxu0 0.0
  %451 = vmatpush1.msra.mxu0 0.0
  %452 = vmatprep.subr.mxu0 0.0
  %453 = vmatpush1.msra.mxu0 0.0
  %454 = vmatprep.subr.mxu0 0.0
  %455 = vmatpush1.msra.mxu0 0.0
  %456 = vmatprep.subr.mxu0 0.0
  %457 = vmatpush1.msra.mxu0 0.0
  %458 = vmatprep.subr.mxu0 0.0
  %459 = vmatpush1.msra.mxu0 0.0
  %460 = vmatprep.subr.mxu0 0.0
  %461 = vmatpush1.msra.mxu0 0.0
  %462 = vmatprep.subr.mxu0 0.0
  %463 = vmatpush1.msra.mxu0 0.0
  %464 = vmatprep.subr.mxu0 0.0
  %465 = vmatpush1.msra.mxu0 0.0
  %466 = vmatprep.subr.mxu0 0.0
  %467 = vmatpush1.msra.mxu0 0.0
  %468 = vmatprep.subr.mxu0 0.0
  %469 = vmatpush1.msra.mxu0 0.0
  %470 = vmatprep.subr.mxu0 0.0
  %471 = vmatpush1.msra.mxu0 0.0
  %472 = vmatprep.subr.mxu0 0.0
  %473 = vmatpush1.msra.mxu0 0.0
  %474 = vmatprep.subr.mxu0 0.0
  %475 = vmatpush1.msra.mxu0 0.0
  %476 = vmatprep.subr.mxu0 0.0
  %477 = vmatpush1.msra.mxu0 0.0
  %478 = vmatprep.subr.mxu0 0.0
  %479 = vmatpush1.msra.mxu0 0.0
  %480 = vmatprep.subr.mxu0 0.0
  %481 = vmatpush1.msra.mxu0 0.0
  %482 = vmatprep.subr.mxu0 0.0
  %483 = vmatpush1.msra.mxu0 0.0
  %484 = vmatprep.subr.mxu0 0.0
  %485 = vmatpush1.msra.mxu0 0.0
  %486 = vmatprep.subr.mxu0 0.0
  %487 = vmatpush1.msra.mxu0 0.0
  %488 = vmatprep.subr.mxu0 0.0
  %489 = vmatpush1.msra.mxu0 0.0
  %490 = vmatprep.subr.mxu0 0.0
  %491 = vmatpush1.msra.mxu0 0.0
  %492 = vmatprep.subr.mxu0 0.0
  %493 = vmatpush1.msra.mxu0 0.0
  %494 = vmatprep.subr.mxu0 0.0
  %495 = vmatpush1.msra.mxu0 0.0
  %496 = vmatprep.subr.mxu0 0.0
  %497 = vmatpush1.msra.mxu0 0.0
  %498 = vmatprep.subr.mxu0 0.0
  %499 = vmatpush1.msra.mxu0 0.0
  %500 = vmatprep.subr.mxu0 0.0
  %501 = vmatpush1.msra.mxu0 0.0
  %502 = vmatprep.subr.mxu0 0.0
  %503 = vmatpush1.msra.mxu0 0.0
  %504 = vmatprep.subr.mxu0 0.0
  %505 = vmatpush1.msra.mxu0 0.0
  %506 = vmatprep.mubr.f32.mxu0 0.0
  %507 = vmatmul.mubr.f32.gmra.mrb[0].mxu0 %v440
  %v508 = vpop.f32.mrb[0].mxu0
  %v509 = vadd.f32 0.0, %v508
  %v510 = vpop.f32.mrb[0].mxu0
  %511 = vdwg.mxu0
  %v512 = vadd.f32 %v436, %v509
  %v513 = vxor.u32 %v512, 2147483648
  %v514 = vmul.f32 %v513, 1.442695
  %v515 = vpow.pop %v514
  %v516 = vadd.f32 %v515, 1.0
  %v517 = vrcp.pop %v516
  %v518 = vmul.f32 1.0, %v517
  %v519 = vtanh.pop %v512
  %v520 = vmul.f32 %v518, %v428
  %522 = vrot.lane.b32.xlu0 %v519, 64
  %v523 = vpop.permute.xlu0 %522
  %v525 = vmul.f32 %v518, %v523
  %527 = vrot.lane.b32.xlu0 %v525, 32
  %v528 = vpop.permute.xlu0 %527
  %v530 = vadd.f32 %v520, %v528
  %v531 = vtanh.pop %v530
  %533 = vrot.lane.b32.xlu0 %v531, 64
  %v534 = vpop.permute.xlu0 %533
  %v536 = vmul.f32 %v518, %v534
  %s537 = scalar_lea.vmem [#allocation2], 16
  %v538 = vld [vmem:[%s537] sm:$0xff]
  %540 = vrot.lane.b32.xlu0 %v536, 32
  %v541 = vpop.permute.xlu0 %540
  %v542 = vsel %vm194, %v541, 0
  %544 = vmatprep.subr.mxu0 0.0
  %545 = vmatpush1.msra.mxu0 %v332
  %546 = vmatprep.subr.mxu0 0.0
  %547 = vmatpush1.msra.mxu0 %v333
  %548 = vmatprep.subr.mxu0 0.0
  %549 = vmatpush1.msra.mxu0 %v334
  %550 = vmatprep.subr.mxu0 0.0
  %551 = vmatpush1.msra.mxu0 %v335
  %552 = vmatprep.subr.mxu0 0.0
  %553 = vmatpush1.msra.mxu0 0.0
  %554 = vmatprep.subr.mxu0 0.0
  %555 = vmatpush1.msra.mxu0 0.0
  %556 = vmatprep.subr.mxu0 0.0
  %557 = vmatpush1.msra.mxu0 0.0
  %558 = vmatprep.subr.mxu0 0.0
  %559 = vmatpush1.msra.mxu0 0.0
  %560 = vmatprep.subr.mxu0 0.0
  %561 = vmatpush1.msra.mxu0 0.0
  %562 = vmatprep.subr.mxu0 0.0
  %563 = vmatpush1.msra.mxu0 0.0
  %564 = vmatprep.subr.mxu0 0.0
  %565 = vmatpush1.msra.mxu0 0.0
  %566 = vmatprep.subr.mxu0 0.0
  %567 = vmatpush1.msra.mxu0 0.0
  %568 = vmatprep.subr.mxu0 0.0
  %569 = vmatpush1.msra.mxu0 0.0
  %570 = vmatprep.subr.mxu0 0.0
  %571 = vmatpush1.msra.mxu0 0.0
  %572 = vmatprep.subr.mxu0 0.0
  %573 = vmatpush1.msra.mxu0 0.0
  %574 = vmatprep.subr.mxu0 0.0
  %575 = vmatpush1.msra.mxu0 0.0
  %576 = vmatprep.subr.mxu0 0.0
  %577 = vmatpush1.msra.mxu0 0.0
  %578 = vmatprep.subr.mxu0 0.0
  %579 = vmatpush1.msra.mxu0 0.0
  %580 = vmatprep.subr.mxu0 0.0
  %581 = vmatpush1.msra.mxu0 0.0
  %582 = vmatprep.subr.mxu0 0.0
  %583 = vmatpush1.msra.mxu0 0.0
  %584 = vmatprep.subr.mxu0 0.0
  %585 = vmatpush1.msra.mxu0 0.0
  %586 = vmatprep.subr.mxu0 0.0
  %587 = vmatpush1.msra.mxu0 0.0
  %588 = vmatprep.subr.mxu0 0.0
  %589 = vmatpush1.msra.mxu0 0.0
  %590 = vmatprep.subr.mxu0 0.0
  %591 = vmatpush1.msra.mxu0 0.0
  %592 = vmatprep.subr.mxu0 0.0
  %593 = vmatpush1.msra.mxu0 0.0
  %594 = vmatprep.subr.mxu0 0.0
  %595 = vmatpush1.msra.mxu0 0.0
  %596 = vmatprep.subr.mxu0 0.0
  %597 = vmatpush1.msra.mxu0 0.0
  %598 = vmatprep.subr.mxu0 0.0
  %599 = vmatpush1.msra.mxu0 0.0
  %600 = vmatprep.subr.mxu0 0.0
  %601 = vmatpush1.msra.mxu0 0.0
  %602 = vmatprep.subr.mxu0 0.0
  %603 = vmatpush1.msra.mxu0 0.0
  %604 = vmatprep.subr.mxu0 0.0
  %605 = vmatpush1.msra.mxu0 0.0
  %606 = vmatprep.subr.mxu0 0.0
  %607 = vmatpush1.msra.mxu0 0.0
  %608 = vmatprep.mubr.f32.mxu0 0.0
  %609 = vmatmul.mubr.f32.gmra.mrb[0].mxu0 %v542
  %v610 = vpop.f32.mrb[0].mxu0
  %v611 = vadd.f32 0.0, %v610
  %v612 = vpop.f32.mrb[0].mxu0
  %613 = vdwg.mxu0
  %v614 = vadd.f32 %v538, %v611
  %v615 = vxor.u32 %v614, 2147483648
  %v616 = vmul.f32 %v615, 1.442695
  %v617 = vpow.pop %v616
  %v618 = vadd.f32 %v617, 1.0
  %v619 = vrcp.pop %v618
  %v620 = vmul.f32 1.0, %v619
  %v621 = vtanh.pop %v614
  %v622 = vmul.f32 %v620, %v530
  %624 = vrot.lane.b32.xlu0 %v621, 64
  %v625 = vpop.permute.xlu0 %624
  %v627 = vmul.f32 %v620, %v625
  %629 = vrot.lane.b32.xlu0 %v627, 32
  %v630 = vpop.permute.xlu0 %629
  %v632 = vadd.f32 %v622, %v630
  %v633 = vtanh.pop %v632
  %635 = vrot.lane.b32.xlu0 %v633, 64
  %v636 = vpop.permute.xlu0 %635
  %v638 = vmul.f32 %v620, %v636
  %s639 = scalar_lea.vmem [#allocation2], 24
  %v640 = vld [vmem:[%s639] sm:$0xff]
  %642 = vrot.lane.b32.xlu0 %v638, 32
  %v643 = vpop.permute.xlu0 %642
  %v644 = vsel %vm194, %v643, 0
  %646 = vmatprep.subr.mxu0 0.0
  %647 = vmatpush1.msra.mxu0 %v332
  %648 = vmatprep.subr.mxu0 0.0
  %649 = vmatpush1.msra.mxu0 %v333
  %650 = vmatprep.subr.mxu0 0.0
  %651 = vmatpush1.msra.mxu0 %v334
  %652 = vmatprep.subr.mxu0 0.0
  %653 = vmatpush1.msra.mxu0 %v335
  %654 = vmatprep.subr.mxu0 0.0
  %655 = vmatpush1.msra.mxu0 0.0
  %656 = vmatprep.subr.mxu0 0.0
  %657 = vmatpush1.msra.mxu0 0.0
  %658 = vmatprep.subr.mxu0 0.0
  %659 = vmatpush1.msra.mxu0 0.0
  %660 = vmatprep.subr.mxu0 0.0
  %661 = vmatpush1.msra.mxu0 0.0
  %662 = vmatprep.subr.mxu0 0.0
  %663 = vmatpush1.msra.mxu0 0.0
  %664 = vmatprep.subr.mxu0 0.0
  %665 = vmatpush1.msra.mxu0 0.0
  %666 = vmatprep.subr.mxu0 0.0
  %667 = vmatpush1.msra.mxu0 0.0
  %668 = vmatprep.subr.mxu0 0.0
  %669 = vmatpush1.msra.mxu0 0.0
  %670 = vmatprep.subr.mxu0 0.0
  %671 = vmatpush1.msra.mxu0 0.0
  %672 = vmatprep.subr.mxu0 0.0
  %673 = vmatpush1.msra.mxu0 0.0
  %674 = vmatprep.subr.mxu0 0.0
  %675 = vmatpush1.msra.mxu0 0.0
  %676 = vmatprep.subr.mxu0 0.0
  %677 = vmatpush1.msra.mxu0 0.0
  %678 = vmatprep.subr.mxu0 0.0
  %679 = vmatpush1.msra.mxu0 0.0
  %680 = vmatprep.subr.mxu0 0.0
  %681 = vmatpush1.msra.mxu0 0.0
  %682 = vmatprep.subr.mxu0 0.0
  %683 = vmatpush1.msra.mxu0 0.0
  %684 = vmatprep.subr.mxu0 0.0
  %685 = vmatpush1.msra.mxu0 0.0
  %686 = vmatprep.subr.mxu0 0.0
  %687 = vmatpush1.msra.mxu0 0.0
  %688 = vmatprep.subr.mxu0 0.0
  %689 = vmatpush1.msra.mxu0 0.0
  %690 = vmatprep.subr.mxu0 0.0
  %691 = vmatpush1.msra.mxu0 0.0
  %692 = vmatprep.subr.mxu0 0.0
  %693 = vmatpush1.msra.mxu0 0.0
  %694 = vmatprep.subr.mxu0 0.0
  %695 = vmatpush1.msra.mxu0 0.0
  %696 = vmatprep.subr.mxu0 0.0
  %697 = vmatpush1.msra.mxu0 0.0
  %698 = vmatprep.subr.mxu0 0.0
  %699 = vmatpush1.msra.mxu0 0.0
  %700 = vmatprep.subr.mxu0 0.0
  %701 = vmatpush1.msra.mxu0 0.0
  %702 = vmatprep.subr.mxu0 0.0
  %703 = vmatpush1.msra.mxu0 0.0
  %704 = vmatprep.subr.mxu0 0.0
  %705 = vmatpush1.msra.mxu0 0.0
  %706 = vmatprep.subr.mxu0 0.0
  %707 = vmatpush1.msra.mxu0 0.0
  %708 = vmatprep.subr.mxu0 0.0
  %709 = vmatpush1.msra.mxu0 0.0
  %710 = vmatprep.mubr.f32.mxu0 0.0
  %711 = vmatmul.mubr.f32.gmra.mrb[0].mxu0 %v644
  %v712 = vpop.f32.mrb[0].mxu0
  %v713 = vadd.f32 0.0, %v712
  %v714 = vpop.f32.mrb[0].mxu0
  %715 = vdwg.mxu0
  %v716 = vadd.f32 %v640, %v713
  %v717 = vxor.u32 %v716, 2147483648
  %v718 = vmul.f32 %v717, 1.442695
  %v719 = vpow.pop %v718
  %v720 = vadd.f32 %v719, 1.0
  %v721 = vrcp.pop %v720
  %v722 = vmul.f32 1.0, %v721
  %v723 = vtanh.pop %v716
  %v724 = vmul.f32 %v722, %v632
  %726 = vrot.lane.b32.xlu0 %v723, 64
  %v727 = vpop.permute.xlu0 %726
  %v729 = vmul.f32 %v722, %v727
  %731 = vrot.lane.b32.xlu0 %v729, 32
  %v732 = vpop.permute.xlu0 %731
  %v734 = vadd.f32 %v724, %v732
  %v735 = vtanh.pop %v734
  %737 = vrot.lane.b32.xlu0 %v735, 64
  %v738 = vpop.permute.xlu0 %737
  %v740 = vmul.f32 %v722, %v738
  %s741 = scalar_lea.vmem [#allocation2], 32
  %v742 = vld [vmem:[%s741] sm:$0xff]
  %744 = vrot.lane.b32.xlu0 %v740, 32
  %v745 = vpop.permute.xlu0 %744
  %v746 = vsel %vm194, %v745, 0
  %748 = vmatprep.subr.mxu0 0.0
  %749 = vmatpush1.msra.mxu0 %v332
  %750 = vmatprep.subr.mxu0 0.0
  %751 = vmatpush1.msra.mxu0 %v333
  %752 = vmatprep.subr.mxu0 0.0
  %753 = vmatpush1.msra.mxu0 %v334
  %754 = vmatprep.subr.mxu0 0.0
  %755 = vmatpush1.msra.mxu0 %v335
  %756 = vmatprep.subr.mxu0 0.0
  %757 = vmatpush1.msra.mxu0 0.0
  %758 = vmatprep.subr.mxu0 0.0
  %759 = vmatpush1.msra.mxu0 0.0
  %760 = vmatprep.subr.mxu0 0.0
  %761 = vmatpush1.msra.mxu0 0.0
  %762 = vmatprep.subr.mxu0 0.0
  %763 = vmatpush1.msra.mxu0 0.0
  %764 = vmatprep.subr.mxu0 0.0
  %765 = vmatpush1.msra.mxu0 0.0
  %766 = vmatprep.subr.mxu0 0.0
  %767 = vmatpush1.msra.mxu0 0.0
  %768 = vmatprep.subr.mxu0 0.0
  %769 = vmatpush1.msra.mxu0 0.0
  %770 = vmatprep.subr.mxu0 0.0
  %771 = vmatpush1.msra.mxu0 0.0
  %772 = vmatprep.subr.mxu0 0.0
  %773 = vmatpush1.msra.mxu0 0.0
  %774 = vmatprep.subr.mxu0 0.0
  %775 = vmatpush1.msra.mxu0 0.0
  %776 = vmatprep.subr.mxu0 0.0
  %777 = vmatpush1.msra.mxu0 0.0
  %778 = vmatprep.subr.mxu0 0.0
  %779 = vmatpush1.msra.mxu0 0.0
  %780 = vmatprep.subr.mxu0 0.0
  %781 = vmatpush1.msra.mxu0 0.0
  %782 = vmatprep.subr.mxu0 0.0
  %783 = vmatpush1.msra.mxu0 0.0
  %784 = vmatprep.subr.mxu0 0.0
  %785 = vmatpush1.msra.mxu0 0.0
  %786 = vmatprep.subr.mxu0 0.0
  %787 = vmatpush1.msra.mxu0 0.0
  %788 = vmatprep.subr.mxu0 0.0
  %789 = vmatpush1.msra.mxu0 0.0
  %790 = vmatprep.subr.mxu0 0.0
  %791 = vmatpush1.msra.mxu0 0.0
  %792 = vmatprep.subr.mxu0 0.0
  %793 = vmatpush1.msra.mxu0 0.0
  %794 = vmatprep.subr.mxu0 0.0
  %795 = vmatpush1.msra.mxu0 0.0
  %796 = vmatprep.subr.mxu0 0.0
  %797 = vmatpush1.msra.mxu0 0.0
  %798 = vmatprep.subr.mxu0 0.0
  %799 = vmatpush1.msra.mxu0 0.0
  %800 = vmatprep.subr.mxu0 0.0
  %801 = vmatpush1.msra.mxu0 0.0
  %802 = vmatprep.subr.mxu0 0.0
  %803 = vmatpush1.msra.mxu0 0.0
  %804 = vmatprep.subr.mxu0 0.0
  %805 = vmatpush1.msra.mxu0 0.0
  %806 = vmatprep.subr.mxu0 0.0
  %807 = vmatpush1.msra.mxu0 0.0
  %808 = vmatprep.subr.mxu0 0.0
  %809 = vmatpush1.msra.mxu0 0.0
  %810 = vmatprep.subr.mxu0 0.0
  %811 = vmatpush1.msra.mxu0 0.0
  %812 = vmatprep.mubr.f32.mxu0 0.0
  %813 = vmatmul.mubr.f32.gmra.mrb[0].mxu0 %v746
  %v814 = vpop.f32.mrb[0].mxu0
  %v815 = vadd.f32 0.0, %v814
  %v816 = vpop.f32.mrb[0].mxu0
  %817 = vdwg.mxu0
  %v818 = vadd.f32 %v742, %v815
  %v819 = vxor.u32 %v818, 2147483648
  %v820 = vmul.f32 %v819, 1.442695
  %v821 = vpow.pop %v820
  %v822 = vadd.f32 %v821, 1.0
  %v823 = vrcp.pop %v822
  %v824 = vmul.f32 1.0, %v823
  %v825 = vtanh.pop %v818
  %v826 = vmul.f32 %v824, %v734
  %828 = vrot.lane.b32.xlu0 %v825, 64
  %v829 = vpop.permute.xlu0 %828
  %v831 = vmul.f32 %v824, %v829
  %833 = vrot.lane.b32.xlu0 %v831, 32
  %v834 = vpop.permute.xlu0 %833
  %v836 = vadd.f32 %v826, %v834
  %v837 = vtanh.pop %v836
  %839 = vrot.lane.b32.xlu0 %v837, 64
  %v840 = vpop.permute.xlu0 %839
  %v842 = vmul.f32 %v824, %v840
  %s843 = scalar_lea.vmem [#allocation2], 40
  %v844 = vld [vmem:[%s843] sm:$0xff]
  %846 = vrot.lane.b32.xlu0 %v842, 32
  %v847 = vpop.permute.xlu0 %846
  %v848 = vsel %vm194, %v847, 0
  %850 = vmatprep.subr.mxu0 0.0
  %851 = vmatpush1.msra.mxu0 %v332
  %852 = vmatprep.subr.mxu0 0.0
  %853 = vmatpush1.msra.mxu0 %v333
  %854 = vmatprep.subr.mxu0 0.0
  %855 = vmatpush1.msra.mxu0 %v334
  %856 = vmatprep.subr.mxu0 0.0
  %857 = vmatpush1.msra.mxu0 %v335
  %858 = vmatprep.subr.mxu0 0.0
  %859 = vmatpush1.msra.mxu0 0.0
  %860 = vmatprep.subr.mxu0 0.0
  %861 = vmatpush1.msra.mxu0 0.0
  %862 = vmatprep.subr.mxu0 0.0
  %863 = vmatpush1.msra.mxu0 0.0
  %864 = vmatprep.subr.mxu0 0.0
  %865 = vmatpush1.msra.mxu0 0.0
  %866 = vmatprep.subr.mxu0 0.0
  %867 = vmatpush1.msra.mxu0 0.0
  %868 = vmatprep.subr.mxu0 0.0
  %869 = vmatpush1.msra.mxu0 0.0
  %870 = vmatprep.subr.mxu0 0.0
  %871 = vmatpush1.msra.mxu0 0.0
  %872 = vmatprep.subr.mxu0 0.0
  %873 = vmatpush1.msra.mxu0 0.0
  %874 = vmatprep.subr.mxu0 0.0
  %875 = vmatpush1.msra.mxu0 0.0
  %876 = vmatprep.subr.mxu0 0.0
  %877 = vmatpush1.msra.mxu0 0.0
  %878 = vmatprep.subr.mxu0 0.0
  %879 = vmatpush1.msra.mxu0 0.0
  %880 = vmatprep.subr.mxu0 0.0
  %881 = vmatpush1.msra.mxu0 0.0
  %882 = vmatprep.subr.mxu0 0.0
  %883 = vmatpush1.msra.mxu0 0.0
  %884 = vmatprep.subr.mxu0 0.0
  %885 = vmatpush1.msra.mxu0 0.0
  %886 = vmatprep.subr.mxu0 0.0
  %887 = vmatpush1.msra.mxu0 0.0
  %888 = vmatprep.subr.mxu0 0.0
  %889 = vmatpush1.msra.mxu0 0.0
  %890 = vmatprep.subr.mxu0 0.0
  %891 = vmatpush1.msra.mxu0 0.0
  %892 = vmatprep.subr.mxu0 0.0
  %893 = vmatpush1.msra.mxu0 0.0
  %894 = vmatprep.subr.mxu0 0.0
  %895 = vmatpush1.msra.mxu0 0.0
  %896 = vmatprep.subr.mxu0 0.0
  %897 = vmatpush1.msra.mxu0 0.0
  %898 = vmatprep.subr.mxu0 0.0
  %899 = vmatpush1.msra.mxu0 0.0
  %900 = vmatprep.subr.mxu0 0.0
  %901 = vmatpush1.msra.mxu0 0.0
  %902 = vmatprep.subr.mxu0 0.0
  %903 = vmatpush1.msra.mxu0 0.0
  %904 = vmatprep.subr.mxu0 0.0
  %905 = vmatpush1.msra.mxu0 0.0
  %906 = vmatprep.subr.mxu0 0.0
  %907 = vmatpush1.msra.mxu0 0.0
  %908 = vmatprep.subr.mxu0 0.0
  %909 = vmatpush1.msra.mxu0 0.0
  %910 = vmatprep.subr.mxu0 0.0
  %911 = vmatpush1.msra.mxu0 0.0
  %912 = vmatprep.subr.mxu0 0.0
  %913 = vmatpush1.msra.mxu0 0.0
  %914 = vmatprep.mubr.f32.mxu0 0.0
  %915 = vmatmul.mubr.f32.gmra.mrb[0].mxu0 %v848
  %v916 = vpop.f32.mrb[0].mxu0
  %v917 = vadd.f32 0.0, %v916
  %v918 = vpop.f32.mrb[0].mxu0
  %919 = vdwg.mxu0
  %v920 = vadd.f32 %v844, %v917
  %v921 = vxor.u32 %v920, 2147483648
  %v922 = vmul.f32 %v921, 1.442695
  %v923 = vpow.pop %v922
  %v924 = vadd.f32 %v923, 1.0
  %v925 = vrcp.pop %v924
  %v926 = vmul.f32 1.0, %v925
  %v927 = vtanh.pop %v920
  %v928 = vmul.f32 %v926, %v836
  %930 = vrot.lane.b32.xlu0 %v927, 64
  %v931 = vpop.permute.xlu0 %930
  %v933 = vmul.f32 %v926, %v931
  %935 = vrot.lane.b32.xlu0 %v933, 32
  %v936 = vpop.permute.xlu0 %935
  %v938 = vadd.f32 %v928, %v936
  %v939 = vtanh.pop %v938
  %941 = vrot.lane.b32.xlu0 %v939, 64
  %v942 = vpop.permute.xlu0 %941
  %v944 = vmul.f32 %v926, %v942
  %s945 = scalar_lea.vmem [#allocation2], 48
  %v946 = vld [vmem:[%s945] sm:$0xff]
  %948 = vrot.lane.b32.xlu0 %v944, 32
  %v949 = vpop.permute.xlu0 %948
  %v950 = vsel %vm194, %v949, 0
  %952 = vmatprep.subr.mxu0 0.0
  %953 = vmatpush1.msra.mxu0 %v332
  %954 = vmatprep.subr.mxu0 0.0
  %955 = vmatpush1.msra.mxu0 %v333
  %956 = vmatprep.subr.mxu0 0.0
  %957 = vmatpush1.msra.mxu0 %v334
  %958 = vmatprep.subr.mxu0 0.0
  %959 = vmatpush1.msra.mxu0 %v335
  %960 = vmatprep.subr.mxu0 0.0
  %961 = vmatpush1.msra.mxu0 0.0
  %962 = vmatprep.subr.mxu0 0.0
  %963 = vmatpush1.msra.mxu0 0.0
  %964 = vmatprep.subr.mxu0 0.0
  %965 = vmatpush1.msra.mxu0 0.0
  %966 = vmatprep.subr.mxu0 0.0
  %967 = vmatpush1.msra.mxu0 0.0
  %968 = vmatprep.subr.mxu0 0.0
  %969 = vmatpush1.msra.mxu0 0.0
  %970 = vmatprep.subr.mxu0 0.0
  %971 = vmatpush1.msra.mxu0 0.0
  %972 = vmatprep.subr.mxu0 0.0
  %973 = vmatpush1.msra.mxu0 0.0
  %974 = vmatprep.subr.mxu0 0.0
  %975 = vmatpush1.msra.mxu0 0.0
  %976 = vmatprep.subr.mxu0 0.0
  %977 = vmatpush1.msra.mxu0 0.0
  %978 = vmatprep.subr.mxu0 0.0
  %979 = vmatpush1.msra.mxu0 0.0
  %980 = vmatprep.subr.mxu0 0.0
  %981 = vmatpush1.msra.mxu0 0.0
  %982 = vmatprep.subr.mxu0 0.0
  %983 = vmatpush1.msra.mxu0 0.0
  %984 = vmatprep.subr.mxu0 0.0
  %985 = vmatpush1.msra.mxu0 0.0
  %986 = vmatprep.subr.mxu0 0.0
  %987 = vmatpush1.msra.mxu0 0.0
  %988 = vmatprep.subr.mxu0 0.0
  %989 = vmatpush1.msra.mxu0 0.0
  %990 = vmatprep.subr.mxu0 0.0
  %991 = vmatpush1.msra.mxu0 0.0
  %992 = vmatprep.subr.mxu0 0.0
  %993 = vmatpush1.msra.mxu0 0.0
  %994 = vmatprep.subr.mxu0 0.0
  %995 = vmatpush1.msra.mxu0 0.0
  %996 = vmatprep.subr.mxu0 0.0
  %997 = vmatpush1.msra.mxu0 0.0
  %998 = vmatprep.subr.mxu0 0.0
  %999 = vmatpush1.msra.mxu0 0.0
  %1000 = vmatprep.subr.mxu0 0.0
  %1001 = vmatpush1.msra.mxu0 0.0
  %1002 = vmatprep.subr.mxu0 0.0
  %1003 = vmatpush1.msra.mxu0 0.0
  %1004 = vmatprep.subr.mxu0 0.0
  %1005 = vmatpush1.msra.mxu0 0.0
  %1006 = vmatprep.subr.mxu0 0.0
  %1007 = vmatpush1.msra.mxu0 0.0
  %1008 = vmatprep.subr.mxu0 0.0
  %1009 = vmatpush1.msra.mxu0 0.0
  %1010 = vmatprep.subr.mxu0 0.0
  %1011 = vmatpush1.msra.mxu0 0.0
  %1012 = vmatprep.subr.mxu0 0.0
  %1013 = vmatpush1.msra.mxu0 0.0
  %1014 = vmatprep.subr.mxu0 0.0
  %1015 = vmatpush1.msra.mxu0 0.0
  %1016 = vmatprep.mubr.f32.mxu0 0.0
  %1017 = vmatmul.mubr.f32.gmra.mrb[0].mxu0 %v950
  %v1018 = vpop.f32.mrb[0].mxu0
  %v1019 = vadd.f32 0.0, %v1018
  %v1020 = vpop.f32.mrb[0].mxu0
  %1021 = vdwg.mxu0
  %v1022 = vadd.f32 %v946, %v1019
  %v1023 = vxor.u32 %v1022, 2147483648
  %v1024 = vmul.f32 %v1023, 1.442695
  %v1025 = vpow.pop %v1024
  %v1026 = vadd.f32 %v1025, 1.0
  %v1027 = vrcp.pop %v1026
  %v1028 = vmul.f32 1.0, %v1027
  %v1029 = vtanh.pop %v1022
  %v1030 = vmul.f32 %v1028, %v938
  %1032 = vrot.lane.b32.xlu0 %v1029, 64
  %v1033 = vpop.permute.xlu0 %1032
  %v1035 = vmul.f32 %v1028, %v1033
  %1037 = vrot.lane.b32.xlu0 %v1035, 32
  %v1038 = vpop.permute.xlu0 %1037
  %v1040 = vadd.f32 %v1030, %v1038
  %v1041 = vtanh.pop %v1040
  %1043 = vrot.lane.b32.xlu0 %v1041, 64
  %v1044 = vpop.permute.xlu0 %1043
  %v1046 = vmul.f32 %v1028, %v1044
  %s1047 = scalar_lea.vmem [#allocation2], 56
  %v1048 = vld [vmem:[%s1047] sm:$0xff]
  %1050 = vrot.lane.b32.xlu0 %v1046, 32
  %v1051 = vpop.permute.xlu0 %1050
  %v1052 = vsel %vm194, %v1051, 0
  %1054 = vmatprep.subr.mxu0 0.0
  %1055 = vmatpush1.msra.mxu0 %v332
  %1056 = vmatprep.subr.mxu0 0.0
  %1057 = vmatpush1.msra.mxu0 %v333
  %1058 = vmatprep.subr.mxu0 0.0
  %1059 = vmatpush1.msra.mxu0 %v334
  %1060 = vmatprep.subr.mxu0 0.0
  %1061 = vmatpush1.msra.mxu0 %v335
  %1062 = vmatprep.subr.mxu0 0.0
  %1063 = vmatpush1.msra.mxu0 0.0
  %1064 = vmatprep.subr.mxu0 0.0
  %1065 = vmatpush1.msra.mxu0 0.0
  %1066 = vmatprep.subr.mxu0 0.0
  %1067 = vmatpush1.msra.mxu0 0.0
  %1068 = vmatprep.subr.mxu0 0.0
  %1069 = vmatpush1.msra.mxu0 0.0
  %1070 = vmatprep.subr.mxu0 0.0
  %1071 = vmatpush1.msra.mxu0 0.0
  %1072 = vmatprep.subr.mxu0 0.0
  %1073 = vmatpush1.msra.mxu0 0.0
  %1074 = vmatprep.subr.mxu0 0.0
  %1075 = vmatpush1.msra.mxu0 0.0
  %1076 = vmatprep.subr.mxu0 0.0
  %1077 = vmatpush1.msra.mxu0 0.0
  %1078 = vmatprep.subr.mxu0 0.0
  %1079 = vmatpush1.msra.mxu0 0.0
  %1080 = vmatprep.subr.mxu0 0.0
  %1081 = vmatpush1.msra.mxu0 0.0
  %1082 = vmatprep.subr.mxu0 0.0
  %1083 = vmatpush1.msra.mxu0 0.0
  %1084 = vmatprep.subr.mxu0 0.0
  %1085 = vmatpush1.msra.mxu0 0.0
  %1086 = vmatprep.subr.mxu0 0.0
  %1087 = vmatpush1.msra.mxu0 0.0
  %1088 = vmatprep.subr.mxu0 0.0
  %1089 = vmatpush1.msra.mxu0 0.0
  %1090 = vmatprep.subr.mxu0 0.0
  %1091 = vmatpush1.msra.mxu0 0.0
  %1092 = vmatprep.subr.mxu0 0.0
  %1093 = vmatpush1.msra.mxu0 0.0
  %1094 = vmatprep.subr.mxu0 0.0
  %1095 = vmatpush1.msra.mxu0 0.0
  %1096 = vmatprep.subr.mxu0 0.0
  %1097 = vmatpush1.msra.mxu0 0.0
  %1098 = vmatprep.subr.mxu0 0.0
  %1099 = vmatpush1.msra.mxu0 0.0
  %1100 = vmatprep.subr.mxu0 0.0
  %1101 = vmatpush1.msra.mxu0 0.0
  %1102 = vmatprep.subr.mxu0 0.0
  %1103 = vmatpush1.msra.mxu0 0.0
  %1104 = vmatprep.subr.mxu0 0.0
  %1105 = vmatpush1.msra.mxu0 0.0
  %1106 = vmatprep.subr.mxu0 0.0
  %1107 = vmatpush1.msra.mxu0 0.0
  %1108 = vmatprep.subr.mxu0 0.0
  %1109 = vmatpush1.msra.mxu0 0.0
  %1110 = vmatprep.subr.mxu0 0.0
  %1111 = vmatpush1.msra.mxu0 0.0
  %1112 = vmatprep.subr.mxu0 0.0
  %1113 = vmatpush1.msra.mxu0 0.0
  %1114 = vmatprep.subr.mxu0 0.0
  %1115 = vmatpush1.msra.mxu0 0.0
  %1116 = vmatprep.subr.mxu0 0.0
  %1117 = vmatpush1.msra.mxu0 0.0
  %1118 = vmatprep.mubr.f32.mxu0 0.0
  %1119 = vmatmul.mubr.f32.gmra.mrb[0].mxu0 %v1052
  %v1120 = vpop.f32.mrb[0].mxu0
  %v1121 = vadd.f32 0.0, %v1120
  %v1122 = vpop.f32.mrb[0].mxu0
  %1123 = vdwg.mxu0
  %v1124 = vadd.f32 %v1048, %v1121
  %v1125 = vxor.u32 %v1124, 2147483648
  %v1126 = vmul.f32 %v1125, 1.442695
  %v1127 = vpow.pop %v1126
  %v1128 = vadd.f32 %v1127, 1.0
  %v1129 = vrcp.pop %v1128
  %v1130 = vmul.f32 1.0, %v1129
  %v1131 = vtanh.pop %v1124
  %v1132 = vmul.f32 %v1130, %v1040
  %1134 = vrot.lane.b32.xlu0 %v1131, 64
  %v1135 = vpop.permute.xlu0 %1134
  %v1137 = vmul.f32 %v1130, %v1135
  %1139 = vrot.lane.b32.xlu0 %v1137, 32
  %v1140 = vpop.permute.xlu0 %1139
  %v1142 = vadd.f32 %v1132, %v1140
  %v1143 = vtanh.pop %v1142
  %1145 = vrot.lane.b32.xlu0 %v1143, 64
  %v1146 = vpop.permute.xlu0 %1145
  %v1148 = vmul.f32 %v1130, %v1146
  %v1149 = vtanh.pop %v1148
  %v1150 = vld [vmem:[%s6] sm:$0xff]
  %v1151 = vld [vmem:[%s6 + $0x8] sm:$0xff]
  %v1152 = vld [vmem:[%s6 + $0x10] sm:$0xff]
  %v1153 = vld [vmem:[%s6 + $0x18] sm:$0xff]
  %v1154 = vld [vmem:[%s7] sm:$0x1]
  %v1156 = vlaneseq
  %v1157 = vshrl.u32 %v1156, 7
  %v1158 = vsub.s32 0, %v1157
  %v1159 = vrot.slane %v1154, %v1158
  %1162 = vrot.lane.b32.xlu0 %v1149, 32
  %v1163 = vpop.permute.xlu0 %1162
  %v1164 = vsel %vm194, %v1163, 0
  %1166 = vmatprep.subr.mxu0 0.0
  %1167 = vmatpush1.msra.mxu0 %v1150
  %1168 = vmatprep.subr.mxu0 0.0
  %1169 = vmatpush1.msra.mxu0 %v1151
  %1170 = vmatprep.subr.mxu0 0.0
  %1171 = vmatpush1.msra.mxu0 %v1152
  %1172 = vmatprep.subr.mxu0 0.0
  %1173 = vmatpush1.msra.mxu0 %v1153
  %1174 = vmatprep.subr.mxu0 0.0
  %1175 = vmatpush1.msra.mxu0 0.0
  %1176 = vmatprep.subr.mxu0 0.0
  %1177 = vmatpush1.msra.mxu0 0.0
  %1178 = vmatprep.subr.mxu0 0.0
  %1179 = vmatpush1.msra.mxu0 0.0
  %1180 = vmatprep.subr.mxu0 0.0
  %1181 = vmatpush1.msra.mxu0 0.0
  %1182 = vmatprep.subr.mxu0 0.0
  %1183 = vmatpush1.msra.mxu0 0.0
  %1184 = vmatprep.subr.mxu0 0.0
  %1185 = vmatpush1.msra.mxu0 0.0
  %1186 = vmatprep.subr.mxu0 0.0
  %1187 = vmatpush1.msra.mxu0 0.0
  %1188 = vmatprep.subr.mxu0 0.0
  %1189 = vmatpush1.msra.mxu0 0.0
  %1190 = vmatprep.subr.mxu0 0.0
  %1191 = vmatpush1.msra.mxu0 0.0
  %1192 = vmatprep.subr.mxu0 0.0
  %1193 = vmatpush1.msra.mxu0 0.0
  %1194 = vmatprep.subr.mxu0 0.0
  %1195 = vmatpush1.msra.mxu0 0.0
  %1196 = vmatprep.subr.mxu0 0.0
  %1197 = vmatpush1.msra.mxu0 0.0
  %1198 = vmatprep.subr.mxu0 0.0
  %1199 = vmatpush1.msra.mxu0 0.0
  %1200 = vmatprep.subr.mxu0 0.0
  %1201 = vmatpush1.msra.mxu0 0.0
  %1202 = vmatprep.subr.mxu0 0.0
  %1203 = vmatpush1.msra.mxu0 0.0
  %1204 = vmatprep.subr.mxu0 0.0
  %1205 = vmatpush1.msra.mxu0 0.0
  %1206 = vmatprep.subr.mxu0 0.0
  %1207 = vmatpush1.msra.mxu0 0.0
  %1208 = vmatprep.subr.mxu0 0.0
  %1209 = vmatpush1.msra.mxu0 0.0
  %1210 = vmatprep.subr.mxu0 0.0
  %1211 = vmatpush1.msra.mxu0 0.0
  %1212 = vmatprep.subr.mxu0 0.0
  %1213 = vmatpush1.msra.mxu0 0.0
  %1214 = vmatprep.subr.mxu0 0.0
  %1215 = vmatpush1.msra.mxu0 0.0
  %1216 = vmatprep.subr.mxu0 0.0
  %1217 = vmatpush1.msra.mxu0 0.0
  %1218 = vmatprep.subr.mxu0 0.0
  %1219 = vmatpush1.msra.mxu0 0.0
  %1220 = vmatprep.subr.mxu0 0.0
  %1221 = vmatpush1.msra.mxu0 0.0
  %1222 = vmatprep.subr.mxu0 0.0
  %1223 = vmatpush1.msra.mxu0 0.0
  %1224 = vmatprep.subr.mxu0 0.0
  %1225 = vmatpush1.msra.mxu0 0.0
  %1226 = vmatprep.subr.mxu0 0.0
  %1227 = vmatpush1.msra.mxu0 0.0
  %1228 = vmatprep.subr.mxu0 0.0
  %1229 = vmatpush1.msra.mxu0 0.0
  %1230 = vmatprep.mubr.f32.mxu0 0.0
  %1231 = vmatmul.mubr.f32.gmra.mrb[0].mxu0 %v1164
  %v1232 = vpop.f32.mrb[0].mxu0
  %v1233 = vadd.f32 %v1159, %v1232
  %v1234 = vpop.f32.mrb[0].mxu0
  %1235 = vdwg.mxu0
  %vm1236 = vcmask 31744
  %1237 = vst.msk [vmem:[%s8] sm:$0xff] %vm1236, %v1233
  // Predicated region
  $region34: #{tpu_custom_call.1} parent=0 // pred_check
    _
  $region35: #{tpu_custom_call.1} parent=0 // pred_check_branch
    %1239 = sbr.rel (0) target = $region37
  $region36: #{tpu_custom_call.1} parent=0 // pred_region
    _
  $region37: #{tpu_custom_call.1} parent=0 // pred_fallthru
    _
  // Predicated region
  $region38: #{tpu_custom_call.1} parent=0 // pred_check
    _
  $region39: #{tpu_custom_call.1} parent=0 // pred_check_branch
    %1241 = sbr.rel (0) target = $region41
  $region40: #{tpu_custom_call.1} parent=0 // pred_region
    _
  $region41: #{tpu_custom_call.1} parent=0 // pred_fallthru
    _

</llo_original>
